<compile_context>
chip_gen: v6e
topology: v6e:2x2x1
jax: 0.10.0
libtpu: 0.0.40
codegen_flags: <defaults>
</compile_context>

<pallas_src>
import functools

import jax
import jax.numpy as jnp
from jax import lax
from jax.experimental import pallas as pl
from jax.experimental.pallas import tpu as pltpu


# ---------------------------------------------------------------------------
# Tiling helper: largest tile <= target that divides `dim` and is a multiple
# of `align`; falls back to the full dim (always a legal Pallas block extent).
# ---------------------------------------------------------------------------
def _pick_tile(dim, target, align):
    t = min(target, dim)
    t -= t % align
    while t >= align:
        if dim % t == 0:
            return t
        t -= align
    return dim


# ---------------------------------------------------------------------------
# Kernel 1: tiled, pipelined dense projection  y = x @ W + b
#   grid = (M//tm, N//tn, K//tk), f32 VMEM accumulator, pl.when init/finalize.
# ---------------------------------------------------------------------------
def _linear_kernel(x_ref, w_ref, b_ref, o_ref, acc_ref):
    @pl.when(pl.program_id(2) == 0)
    def _():
        acc_ref[...] = jnp.zeros_like(acc_ref)

    acc_ref[...] += jnp.dot(x_ref[...], w_ref[...],
                            preferred_element_type=jnp.float32)

    @pl.when(pl.program_id(2) == pl.num_programs(2) - 1)
    def _():
        o_ref[...] = (acc_ref[...] + b_ref[...].astype(jnp.float32)).astype(o_ref.dtype)


def linear(x2d, w, b, *, tm=256, tn=256, tk=512):
    """x2d: (M, K), w: (K, N), b: (N,) -> (M, N)."""
    M, K = x2d.shape
    K2, N = w.shape
    assert K == K2 and b.shape == (N,)
    tm = _pick_tile(M, tm, 8)
    tn = _pick_tile(N, tn, 128)
    tk = _pick_tile(K, tk, 128)
    grid = (M // tm, N // tn, K // tk)
    return pl.pallas_call(
        _linear_kernel,
        out_shape=jax.ShapeDtypeStruct((M, N), x2d.dtype),
        grid_spec=pltpu.PrefetchScalarGridSpec(
            num_scalar_prefetch=0,
            grid=grid,
            in_specs=[
                pl.BlockSpec((tm, tk), lambda i, j, k: (i, k)),
                pl.BlockSpec((tk, tn), lambda i, j, k: (k, j)),
                pl.BlockSpec((1, tn), lambda i, j, k: (0, j)),
            ],
            out_specs=pl.BlockSpec((tm, tn), lambda i, j, k: (i, j)),
            scratch_shapes=[pltpu.VMEM((tm, tn), jnp.float32)],
        ),
        compiler_params=pltpu.CompilerParams(
            dimension_semantics=("parallel", "parallel", "arbitrary")),
    )(x2d, w, b.reshape(1, N))


# ---------------------------------------------------------------------------
# Kernel 2: scaled dot-product attention, all heads of one batch per grid step.
#   Input/output blocks are lane-dense (1, S, E); heads are sliced in-kernel
#   (columns h*D:(h+1)*D), so no HBM-level head split/merge transposes exist.
# ---------------------------------------------------------------------------
def _attention_kernel(q_ref, k_ref, v_ref, o_ref, *, num_heads):
    q = q_ref[0]                                     # (S, E), input dtype
    k = k_ref[0]
    v = v_ref[0]
    S, E = q.shape
    D = E // num_heads
    scale = jnp.asarray(1.0 / float(D) ** 0.5, q.dtype)

    # TODO(synk): for long sequences convert to a flash/online-softmax form with
    # a K/V grid axis so the (S, S) score tile stays bounded in VMEM.
    outs = []
    for h in range(num_heads):
        sl = slice(h * D, (h + 1) * D)
        qh = q[:, sl] * scale                        # scale hoisted onto Q
        kh = k[:, sl]
        vh = v[:, sl]
        # Q @ K^T without materializing a transpose: contract the last dims.
        s = lax.dot_general(qh, kh, (((1,), (1,)), ((), ())),
                            preferred_element_type=jnp.float32)      # (S, S) f32
        m = jnp.max(s, axis=-1, keepdims=True)
        p = jnp.exp(s - m)
        p = p * pl.reciprocal(jnp.sum(p, axis=-1, keepdims=True), approx=True)
        ctx = jnp.dot(p.astype(v.dtype), vh,
                      preferred_element_type=jnp.float32)            # (S, D)
        outs.append(ctx)

    # Single lane-dense (S, E) store of the merged heads.
    o_ref[0] = jnp.concatenate(outs, axis=-1).astype(o_ref.dtype)


def mha_attention(q, k, v, num_heads):
    """q, k, v: (B, S, E) projected activations (heads packed along E)."""
    B, S, E = q.shape
    kernel = functools.partial(_attention_kernel, num_heads=num_heads)
    return pl.pallas_call(
        kernel,
        out_shape=jax.ShapeDtypeStruct((B, S, E), q.dtype),
        grid=(B,),
        in_specs=[pl.BlockSpec((1, S, E), lambda b: (b, 0, 0))] * 3,
        out_specs=pl.BlockSpec((1, S, E), lambda b: (b, 0, 0)),
        compiler_params=pltpu.CompilerParams(dimension_semantics=("parallel",)),
    )(q, k, v)


# ---------------------------------------------------------------------------
# Module wrapper (plain-JAX glue is only free reshapes — no transposes)
# ---------------------------------------------------------------------------
def init_mha_params(key, embed_dim):
    ks = jax.random.split(key, 8)
    s = 1.0 / jnp.sqrt(jnp.float32(embed_dim))

    def w(k):
        return (jax.random.uniform(k, (embed_dim, embed_dim), jnp.float32) * 2 - 1) * s

    def b(k):
        return (jax.random.uniform(k, (embed_dim,), jnp.float32) * 2 - 1) * s

    return dict(
        wq=w(ks[0]), bq=b(ks[1]),
        wk=w(ks[2]), bk=b(ks[3]),
        wv=w(ks[4]), bv=b(ks[5]),
        wo=w(ks[6]), bo=b(ks[7]),
    )


def multi_head_attention(params, query, key, value, num_heads):
    # TODO(synk): optional `mask` argument of the torch module is not implemented
    # (this matches the mask=None path used by the forward here).
    B, S, E = query.shape
    q = linear(query.reshape(B * S, E), params["wq"], params["bq"]).reshape(B, S, E)
    k = linear(key.reshape(B * S, E), params["wk"], params["bk"]).reshape(B, S, E)
    v = linear(value.reshape(B * S, E), params["wv"], params["bv"]).reshape(B, S, E)

    ctx = mha_attention(q, k, v, num_heads)                       # (B, S, E)

    out = linear(ctx.reshape(B * S, E), params["wo"], params["bo"])
    return out.reshape(B, S, E)


# ---------------------------------------------------------------------------
# Pure-JAX reference (same math) for a correctness check
# ---------------------------------------------------------------------------
def mha_reference(params, query, key, value, num_heads):
    B, S, E = query.shape
    D = E // num_heads

    def lin(x, w, b):
        return x @ w + b

    def split(x):
        return x.reshape(B, S, num_heads, D).transpose(0, 2, 1, 3)

    Q = split(lin(query, params["wq"], params["bq"]))
    K = split(lin(key, params["wk"], params["bk"]))
    V = split(lin(value, params["wv"], params["bv"]))
    scores = jnp.einsum("bhqd,bhkd->bhqk", Q, K) / jnp.sqrt(jnp.float32(D))
    attn = jax.nn.softmax(scores, axis=-1)
    out = jnp.einsum("bhqk,bhkd->bhqd", attn, V)
    out = out.transpose(0, 2, 1, 3).reshape(B, S, E)
    return lin(out, params["wo"], params["bo"])


if __name__ == "__main__":
    # small shapes consistent with the module: num_heads = 8
    batch, seq, embed_dim, num_heads = 2, 8, 32, 8

    root = jax.random.PRNGKey(0)
    kp, kq, kk, kv = jax.random.split(root, 4)
    params = init_mha_params(kp, embed_dim)
    query = jax.random.normal(kq, (batch, seq, embed_dim), jnp.float32)
    key = jax.random.normal(kk, (batch, seq, embed_dim), jnp.float32)
    value = jax.random.normal(kv, (batch, seq, embed_dim), jnp.float32)

    mha = jax.jit(functools.partial(multi_head_attention, num_heads=num_heads))
    out = jax.block_until_ready(mha(params, query, key, value))

    ref = mha_reference(params, query, key, value, num_heads)
    assert out.shape == (batch, seq, embed_dim)
    # 2e-3 tolerance: approx reciprocal in the softmax changes low-order bits only.
    assert jnp.allclose(out, ref, atol=2e-3, rtol=2e-3), (
        float(jnp.max(jnp.abs(out - ref))))

    print("KERNEL_OK")
</pallas_src>

<mosaic_0001>
module attributes {stable_mosaic.version = 11 : i64} {
  func.func @_linear_kernel(%arg0: i32, %arg1: i32, %arg2: i32, %arg3: memref<16x32xf32, #tpu.memory_space<vmem>>, %arg4: memref<32x32xf32, #tpu.memory_space<vmem>>, %arg5: memref<1x32xf32, #tpu.memory_space<vmem>>, %arg6: memref<16x32xf32, #tpu.memory_space<vmem>>, %arg7: memref<16x32xf32, #tpu.memory_space<vmem>>) attributes {dimension_semantics = [#tpu.dimension_semantics<parallel>, #tpu.dimension_semantics<parallel>, #tpu.dimension_semantics<arbitrary>], iteration_bounds = array<i64: 1, 1, 1>, scalar_prefetch = 0 : i64, scratch_operands = 1 : i64, tpu.core_type = #tpu.core_type<tc>, window_params = [{transform_indices = @transform_0, window_bounds = array<i64: 16, 32>}, {transform_indices = @transform_1, window_bounds = array<i64: 32, 32>}, {transform_indices = @transform_2, window_bounds = array<i64: 1, 32>}, {transform_indices = @transform_3, window_bounds = array<i64: 16, 32>}]} {
    %c0_i32 = arith.constant 0 : i32
    %0 = arith.cmpi eq, %arg2, %c0_i32 : i32
    %1 = arith.extui %0 : i1 to i32
    %c0_i32_0 = arith.constant 0 : i32
    %2 = arith.cmpi ne, %1, %c0_i32_0 : i32
    scf.if %2 {
      %cst_10 = arith.constant 0.000000e+00 : f32
      %12 = vector.broadcast %cst_10 : f32 to vector<16x32xf32>
      %c0_11 = arith.constant 0 : index
      %c0_12 = arith.constant 0 : index
      %13 = vector.load %arg7[%c0_11, %c0_12] : memref<16x32xf32, #tpu.memory_space<vmem>>, vector<16x32xf32>
      tpu.vector_store %arg7[%c0_11, %c0_12], %12 {strides = array<i32>} : memref<16x32xf32, #tpu.memory_space<vmem>>, vector<16x32xf32>,
    } else {
    }
    %c0 = arith.constant 0 : index
    %c0_1 = arith.constant 0 : index
    %3 = vector.load %arg7[%c0, %c0_1] : memref<16x32xf32, #tpu.memory_space<vmem>>, vector<16x32xf32>
    %c0_2 = arith.constant 0 : index
    %c0_3 = arith.constant 0 : index
    %4 = vector.load %arg3[%c0_2, %c0_3] : memref<16x32xf32, #tpu.memory_space<vmem>>, vector<16x32xf32>
    %c0_4 = arith.constant 0 : index
    %c0_5 = arith.constant 0 : index
    %5 = vector.load %arg4[%c0_4, %c0_5] : memref<32x32xf32, #tpu.memory_space<vmem>>, vector<32x32xf32>
    %cst = arith.constant dense<0.000000e+00> : vector<16x32xf32>
    %6 = tpu.matmul %4, %5, %cst {dimension_numbers = #tpu.dot_dimension_numbers<[1], [0], [0], [1], [0, 0, 1, 1], [], []>} : vector<16x32xf32>, vector<32x32xf32>, vector<16x32xf32> -> vector<16x32xf32>
    %7 = arith.addf %3, %6 : vector<16x32xf32>
    %c0_6 = arith.constant 0 : index
    %c0_7 = arith.constant 0 : index
    %8 = vector.load %arg7[%c0_6, %c0_7] : memref<16x32xf32, #tpu.memory_space<vmem>>, vector<16x32xf32>
    tpu.vector_store %arg7[%c0_6, %c0_7], %7 {strides = array<i32>} : memref<16x32xf32, #tpu.memory_space<vmem>>, vector<16x32xf32>,
    %c0_i32_8 = arith.constant 0 : i32
    %9 = arith.cmpi eq, %arg2, %c0_i32_8 : i32
    %10 = arith.extui %9 : i1 to i32
    %c0_i32_9 = arith.constant 0 : i32
    %11 = arith.cmpi ne, %10, %c0_i32_9 : i32
    scf.if %11 {
      %c0_10 = arith.constant 0 : index
      %c0_11 = arith.constant 0 : index
      %12 = vector.load %arg7[%c0_10, %c0_11] : memref<16x32xf32, #tpu.memory_space<vmem>>, vector<16x32xf32>
      %c0_12 = arith.constant 0 : index
      %c0_13 = arith.constant 0 : index
      %13 = vector.load %arg5[%c0_12, %c0_13] : memref<1x32xf32, #tpu.memory_space<vmem>>, vector<1x32xf32>
      %14 = vector.broadcast %13 : vector<1x32xf32> to vector<16x32xf32>
      %15 = arith.addf %12, %14 : vector<16x32xf32>
      %c0_14 = arith.constant 0 : index
      %c0_15 = arith.constant 0 : index
      %16 = vector.load %arg6[%c0_14, %c0_15] : memref<16x32xf32, #tpu.memory_space<vmem>>, vector<16x32xf32>
      tpu.vector_store %arg6[%c0_14, %c0_15], %15 {strides = array<i32>} : memref<16x32xf32, #tpu.memory_space<vmem>>, vector<16x32xf32>,
    } else {
    }
    return
  }
  func.func @transform_0(%arg0: i32, %arg1: i32, %arg2: i32) -> (i32, i32) {
    %c0_i32 = arith.constant 0 : i32
    return %arg0, %arg2 : i32, i32
  }
  func.func @transform_1(%arg0: i32, %arg1: i32, %arg2: i32) -> (i32, i32) {
    %c0_i32 = arith.constant 0 : i32
    return %arg2, %arg1 : i32, i32
  }
  func.func @transform_2(%arg0: i32, %arg1: i32, %arg2: i32) -> (i32, i32) {
    %c0_i32 = arith.constant 0 : i32
    %c0_i32_0 = arith.constant 0 : i32
    return %c0_i32, %arg1 : i32, i32
  }
  func.func @transform_3(%arg0: i32, %arg1: i32, %arg2: i32) -> (i32, i32) {
    %c0_i32 = arith.constant 0 : i32
    return %arg0, %arg1 : i32, i32
  }
}

module attributes {stable_mosaic.version = 11 : i64} {
  func.func @_linear_kernel(%arg0: i32, %arg1: i32, %arg2: i32, %arg3: memref<16x32xf32, #tpu.memory_space<vmem>>, %arg4: memref<32x32xf32, #tpu.memory_space<vmem>>, %arg5: memref<1x32xf32, #tpu.memory_space<vmem>>, %arg6: memref<16x32xf32, #tpu.memory_space<vmem>>, %arg7: memref<16x32xf32, #tpu.memory_space<vmem>>) attributes {dimension_semantics = [#tpu.dimension_semantics<parallel>, #tpu.dimension_semantics<parallel>, #tpu.dimension_semantics<arbitrary>], iteration_bounds = array<i64: 1, 1, 1>, scalar_prefetch = 0 : i64, scratch_operands = 1 : i64, tpu.core_type = #tpu.core_type<tc>, window_params = [{transform_indices = @transform_0, window_bounds = array<i64: 16, 32>}, {transform_indices = @transform_1, window_bounds = array<i64: 32, 32>}, {transform_indices = @transform_2, window_bounds = array<i64: 1, 32>}, {transform_indices = @transform_3, window_bounds = array<i64: 16, 32>}]} {
    %c0_i32 = arith.constant 0 : i32
    %0 = arith.cmpi eq, %arg2, %c0_i32 : i32
    %1 = arith.extui %0 : i1 to i32
    %c0_i32_0 = arith.constant 0 : i32
    %2 = arith.cmpi ne, %1, %c0_i32_0 : i32
    scf.if %2 {
      %cst_10 = arith.constant 0.000000e+00 : f32
      %12 = vector.broadcast %cst_10 : f32 to vector<16x32xf32>
      %c0_11 = arith.constant 0 : index
      %c0_12 = arith.constant 0 : index
      %13 = vector.load %arg7[%c0_11, %c0_12] : memref<16x32xf32, #tpu.memory_space<vmem>>, vector<16x32xf32>
      tpu.vector_store %arg7[%c0_11, %c0_12], %12 {strides = array<i32>} : memref<16x32xf32, #tpu.memory_space<vmem>>, vector<16x32xf32>,
    } else {
    }
    %c0 = arith.constant 0 : index
    %c0_1 = arith.constant 0 : index
    %3 = vector.load %arg7[%c0, %c0_1] : memref<16x32xf32, #tpu.memory_space<vmem>>, vector<16x32xf32>
    %c0_2 = arith.constant 0 : index
    %c0_3 = arith.constant 0 : index
    %4 = vector.load %arg3[%c0_2, %c0_3] : memref<16x32xf32, #tpu.memory_space<vmem>>, vector<16x32xf32>
    %c0_4 = arith.constant 0 : index
    %c0_5 = arith.constant 0 : index
    %5 = vector.load %arg4[%c0_4, %c0_5] : memref<32x32xf32, #tpu.memory_space<vmem>>, vector<32x32xf32>
    %cst = arith.constant dense<0.000000e+00> : vector<16x32xf32>
    %6 = tpu.matmul %4, %5, %cst {dimension_numbers = #tpu.dot_dimension_numbers<[1], [0], [0], [1], [0, 0, 1, 1], [], []>} : vector<16x32xf32>, vector<32x32xf32>, vector<16x32xf32> -> vector<16x32xf32>
    %7 = arith.addf %3, %6 : vector<16x32xf32>
    %c0_6 = arith.constant 0 : index
    %c0_7 = arith.constant 0 : index
    %8 = vector.load %arg7[%c0_6, %c0_7] : memref<16x32xf32, #tpu.memory_space<vmem>>, vector<16x32xf32>
    tpu.vector_store %arg7[%c0_6, %c0_7], %7 {strides = array<i32>} : memref<16x32xf32, #tpu.memory_space<vmem>>, vector<16x32xf32>,
    %c0_i32_8 = arith.constant 0 : i32
    %9 = arith.cmpi eq, %arg2, %c0_i32_8 : i32
    %10 = arith.extui %9 : i1 to i32
    %c0_i32_9 = arith.constant 0 : i32
    %11 = arith.cmpi ne, %10, %c0_i32_9 : i32
    scf.if %11 {
      %c0_10 = arith.constant 0 : index
      %c0_11 = arith.constant 0 : index
      %12 = vector.load %arg7[%c0_10, %c0_11] : memref<16x32xf32, #tpu.memory_space<vmem>>, vector<16x32xf32>
      %c0_12 = arith.constant 0 : index
      %c0_13 = arith.constant 0 : index
      %13 = vector.load %arg5[%c0_12, %c0_13] : memref<1x32xf32, #tpu.memory_space<vmem>>, vector<1x32xf32>
      %14 = vector.broadcast %13 : vector<1x32xf32> to vector<16x32xf32>
      %15 = arith.addf %12, %14 : vector<16x32xf32>
      %c0_14 = arith.constant 0 : index
      %c0_15 = arith.constant 0 : index
      %16 = vector.load %arg6[%c0_14, %c0_15] : memref<16x32xf32, #tpu.memory_space<vmem>>, vector<16x32xf32>
      tpu.vector_store %arg6[%c0_14, %c0_15], %15 {strides = array<i32>} : memref<16x32xf32, #tpu.memory_space<vmem>>, vector<16x32xf32>,
    } else {
    }
    return
  }
  func.func @transform_0(%arg0: i32, %arg1: i32, %arg2: i32) -> (i32, i32) {
    %c0_i32 = arith.constant 0 : i32
    return %arg0, %arg2 : i32, i32
  }
  func.func @transform_1(%arg0: i32, %arg1: i32, %arg2: i32) -> (i32, i32) {
    %c0_i32 = arith.constant 0 : i32
    return %arg2, %arg1 : i32, i32
  }
  func.func @transform_2(%arg0: i32, %arg1: i32, %arg2: i32) -> (i32, i32) {
    %c0_i32 = arith.constant 0 : i32
    %c0_i32_0 = arith.constant 0 : i32
    return %c0_i32, %arg1 : i32, i32
  }
  func.func @transform_3(%arg0: i32, %arg1: i32, %arg2: i32) -> (i32, i32) {
    %c0_i32 = arith.constant 0 : i32
    return %arg0, %arg1 : i32, i32
  }
}

module attributes {stable_mosaic.version = 11 : i64} {
  func.func @_attention_kernel(%arg0: i32, %arg1: memref<1x8x32xf32, #tpu.memory_space<vmem>>, %arg2: memref<1x8x32xf32, #tpu.memory_space<vmem>>, %arg3: memref<1x8x32xf32, #tpu.memory_space<vmem>>, %arg4: memref<1x8x32xf32, #tpu.memory_space<vmem>>) attributes {dimension_semantics = [#tpu.dimension_semantics<parallel>], iteration_bounds = array<i64: 2>, scalar_prefetch = 0 : i64, scratch_operands = 0 : i64, tpu.core_type = #tpu.core_type<tc>, window_params = [{transform_indices = @transform_0, window_bounds = array<i64: 1, 8, 32>}, {transform_indices = @transform_1, window_bounds = array<i64: 1, 8, 32>}, {transform_indices = @transform_2, window_bounds = array<i64: 1, 8, 32>}, {transform_indices = @transform_3, window_bounds = array<i64: 1, 8, 32>}]} {
    %c0 = arith.constant 0 : index
    %c0_0 = arith.constant 0 : index
    %c0_1 = arith.constant 0 : index
    %0 = vector.load %arg1[%c0, %c0_0, %c0_1] : memref<1x8x32xf32, #tpu.memory_space<vmem>>, vector<1x8x32xf32>
    %1 = vector.shape_cast %0 : vector<1x8x32xf32> to vector<8x32xf32>
    %c0_2 = arith.constant 0 : index
    %c0_3 = arith.constant 0 : index
    %c0_4 = arith.constant 0 : index
    %2 = vector.load %arg2[%c0_2, %c0_3, %c0_4] : memref<1x8x32xf32, #tpu.memory_space<vmem>>, vector<1x8x32xf32>
    %3 = vector.shape_cast %2 : vector<1x8x32xf32> to vector<8x32xf32>
    %c0_5 = arith.constant 0 : index
    %c0_6 = arith.constant 0 : index
    %c0_7 = arith.constant 0 : index
    %4 = vector.load %arg3[%c0_5, %c0_6, %c0_7] : memref<1x8x32xf32, #tpu.memory_space<vmem>>, vector<1x8x32xf32>
    %5 = vector.shape_cast %4 : vector<1x8x32xf32> to vector<8x32xf32>
    %6 = vector.extract_strided_slice %1 {offsets = [0, 0], sizes = [8, 4], strides = [1, 1]} : vector<8x32xf32> to vector<8x4xf32>
    %cst = arith.constant 5.000000e-01 : f32
    %7 = vector.broadcast %cst : f32 to vector<8x4xf32>
    %8 = arith.mulf %6, %7 : vector<8x4xf32>
    %9 = vector.extract_strided_slice %3 {offsets = [0, 0], sizes = [8, 4], strides = [1, 1]} : vector<8x32xf32> to vector<8x4xf32>
    %10 = vector.extract_strided_slice %5 {offsets = [0, 0], sizes = [8, 4], strides = [1, 1]} : vector<8x32xf32> to vector<8x4xf32>
    %cst_8 = arith.constant dense<0.000000e+00> : vector<8x8xf32>
    %11 = tpu.matmul %8, %9, %cst_8 {dimension_numbers = #tpu.dot_dimension_numbers<[1], [1], [0], [0], [0, 0, 1, 0], [], []>} : vector<8x4xf32>, vector<8x4xf32>, vector<8x8xf32> -> vector<8x8xf32>
    %cst_9 = arith.constant dense<0xFF800000> : vector<8xf32>
    %12 = vector.multi_reduction <maximumf>, %11, %cst_9 [1] : vector<8x8xf32> to vector<8xf32>
    %13 = vector.shape_cast %12 : vector<8xf32> to vector<8x1xf32>
    %14 = vector.broadcast %13 : vector<8x1xf32> to vector<8x8xf32>
    %15 = arith.subf %11, %14 : vector<8x8xf32>
    %16 = math.exp %15 : vector<8x8xf32>
    %cst_10 = arith.constant dense<0.000000e+00> : vector<8xf32>
    %17 = vector.multi_reduction <add>, %16, %cst_10 [1] : vector<8x8xf32> to vector<8xf32>
    %18 = vector.shape_cast %17 : vector<8xf32> to vector<8x1xf32>
    %19 = tpu.reciprocal %18 {approx = true} : vector<8x1xf32> -> vector<8x1xf32>
    %20 = vector.broadcast %19 : vector<8x1xf32> to vector<8x8xf32>
    %21 = arith.mulf %16, %20 : vector<8x8xf32>
    %cst_11 = arith.constant dense<0.000000e+00> : vector<8x4xf32>
    %22 = tpu.matmul %21, %10, %cst_11 {dimension_numbers = #tpu.dot_dimension_numbers<[1], [0], [0], [1], [0, 0, 1, 1], [], []>} : vector<8x8xf32>, vector<8x4xf32>, vector<8x4xf32> -> vector<8x4xf32>
    %23 = vector.extract_strided_slice %1 {offsets = [0, 4], sizes = [8, 4], strides = [1, 1]} : vector<8x32xf32> to vector<8x4xf32>
    %cst_12 = arith.constant 5.000000e-01 : f32
    %24 = vector.broadcast %cst_12 : f32 to vector<8x4xf32>
    %25 = arith.mulf %23, %24 : vector<8x4xf32>
    %26 = vector.extract_strided_slice %3 {offsets = [0, 4], sizes = [8, 4], strides = [1, 1]} : vector<8x32xf32> to vector<8x4xf32>
    %27 = vector.extract_strided_slice %5 {offsets = [0, 4], sizes = [8, 4], strides = [1, 1]} : vector<8x32xf32> to vector<8x4xf32>
    %cst_13 = arith.constant dense<0.000000e+00> : vector<8x8xf32>
    %28 = tpu.matmul %25, %26, %cst_13 {dimension_numbers = #tpu.dot_dimension_numbers<[1], [1], [0], [0], [0, 0, 1, 0], [], []>} : vector<8x4xf32>, vector<8x4xf32>, vector<8x8xf32> -> vector<8x8xf32>
    %cst_14 = arith.constant dense<0xFF800000> : vector<8xf32>
    %29 = vector.multi_reduction <maximumf>, %28, %cst_14 [1] : vector<8x8xf32> to vector<8xf32>
    %30 = vector.shape_cast %29 : vector<8xf32> to vector<8x1xf32>
    %31 = vector.broadcast %30 : vector<8x1xf32> to vector<8x8xf32>
    %32 = arith.subf %28, %31 : vector<8x8xf32>
    %33 = math.exp %32 : vector<8x8xf32>
    %cst_15 = arith.constant dense<0.000000e+00> : vector<8xf32>
    %34 = vector.multi_reduction <add>, %33, %cst_15 [1] : vector<8x8xf32> to vector<8xf32>
    %35 = vector.shape_cast %34 : vector<8xf32> to vector<8x1xf32>
    %36 = tpu.reciprocal %35 {approx = true} : vector<8x1xf32> -> vector<8x1xf32>
    %37 = vector.broadcast %36 : vector<8x1xf32> to vector<8x8xf32>
    %38 = arith.mulf %33, %37 : vector<8x8xf32>
    %cst_16 = arith.constant dense<0.000000e+00> : vector<8x4xf32>
    %39 = tpu.matmul %38, %27, %cst_16 {dimension_numbers = #tpu.dot_dimension_numbers<[1], [0], [0], [1], [0, 0, 1, 1], [], []>} : vector<8x8xf32>, vector<8x4xf32>, vector<8x4xf32> -> vector<8x4xf32>
    %40 = vector.extract_strided_slice %1 {offsets = [0, 8], sizes = [8, 4], strides = [1, 1]} : vector<8x32xf32> to vector<8x4xf32>
    %cst_17 = arith.constant 5.000000e-01 : f32
    %41 = vector.broadcast %cst_17 : f32 to vector<8x4xf32>
    %42 = arith.mulf %40, %41 : vector<8x4xf32>
    %43 = vector.extract_strided_slice %3 {offsets = [0, 8], sizes = [8, 4], strides = [1, 1]} : vector<8x32xf32> to vector<8x4xf32>
    %44 = vector.extract_strided_slice %5 {offsets = [0, 8], sizes = [8, 4], strides = [1, 1]} : vector<8x32xf32> to vector<8x4xf32>
    %cst_18 = arith.constant dense<0.000000e+00> : vector<8x8xf32>
    %45 = tpu.matmul %42, %43, %cst_18 {dimension_numbers = #tpu.dot_dimension_numbers<[1], [1], [0], [0], [0, 0, 1, 0], [], []>} : vector<8x4xf32>, vector<8x4xf32>, vector<8x8xf32> -> vector<8x8xf32>
    %cst_19 = arith.constant dense<0xFF800000> : vector<8xf32>
    %46 = vector.multi_reduction <maximumf>, %45, %cst_19 [1] : vector<8x8xf32> to vector<8xf32>
    %47 = vector.shape_cast %46 : vector<8xf32> to vector<8x1xf32>
    %48 = vector.broadcast %47 : vector<8x1xf32> to vector<8x8xf32>
    %49 = arith.subf %45, %48 : vector<8x8xf32>
    %50 = math.exp %49 : vector<8x8xf32>
    %cst_20 = arith.constant dense<0.000000e+00> : vector<8xf32>
    %51 = vector.multi_reduction <add>, %50, %cst_20 [1] : vector<8x8xf32> to vector<8xf32>
    %52 = vector.shape_cast %51 : vector<8xf32> to vector<8x1xf32>
    %53 = tpu.reciprocal %52 {approx = true} : vector<8x1xf32> -> vector<8x1xf32>
    %54 = vector.broadcast %53 : vector<8x1xf32> to vector<8x8xf32>
    %55 = arith.mulf %50, %54 : vector<8x8xf32>
    %cst_21 = arith.constant dense<0.000000e+00> : vector<8x4xf32>
    %56 = tpu.matmul %55, %44, %cst_21 {dimension_numbers = #tpu.dot_dimension_numbers<[1], [0], [0], [1], [0, 0, 1, 1], [], []>} : vector<8x8xf32>, vector<8x4xf32>, vector<8x4xf32> -> vector<8x4xf32>
    %57 = vector.extract_strided_slice %1 {offsets = [0, 12], sizes = [8, 4], strides = [1, 1]} : vector<8x32xf32> to vector<8x4xf32>
    %cst_22 = arith.constant 5.000000e-01 : f32
    %58 = vector.broadcast %cst_22 : f32 to vector<8x4xf32>
    %59 = arith.mulf %57, %58 : vector<8x4xf32>
    %60 = vector.extract_strided_slice %3 {offsets = [0, 12], sizes = [8, 4], strides = [1, 1]} : vector<8x32xf32> to vector<8x4xf32>
    %61 = vector.extract_strided_slice %5 {offsets = [0, 12], sizes = [8, 4], strides = [1, 1]} : vector<8x32xf32> to vector<8x4xf32>
    %cst_23 = arith.constant dense<0.000000e+00> : vector<8x8xf32>
    %62 = tpu.matmul %59, %60, %cst_23 {dimension_numbers = #tpu.dot_dimension_numbers<[1], [1], [0], [0], [0, 0, 1, 0], [], []>} : vector<8x4xf32>, vector<8x4xf32>, vector<8x8xf32> -> vector<8x8xf32>
    %cst_24 = arith.constant dense<0xFF800000> : vector<8xf32>
    %63 = vector.multi_reduction <maximumf>, %62, %cst_24 [1] : vector<8x8xf32> to vector<8xf32>
    %64 = vector.shape_cast %63 : vector<8xf32> to vector<8x1xf32>
    %65 = vector.broadcast %64 : vector<8x1xf32> to vector<8x8xf32>
    %66 = arith.subf %62, %65 : vector<8x8xf32>
    %67 = math.exp %66 : vector<8x8xf32>
    %cst_25 = arith.constant dense<0.000000e+00> : vector<8xf32>
    %68 = vector.multi_reduction <add>, %67, %cst_25 [1] : vector<8x8xf32> to vector<8xf32>
    %69 = vector.shape_cast %68 : vector<8xf32> to vector<8x1xf32>
    %70 = tpu.reciprocal %69 {approx = true} : vector<8x1xf32> -> vector<8x1xf32>
    %71 = vector.broadcast %70 : vector<8x1xf32> to vector<8x8xf32>
    %72 = arith.mulf %67, %71 : vector<8x8xf32>
    %cst_26 = arith.constant dense<0.000000e+00> : vector<8x4xf32>
    %73 = tpu.matmul %72, %61, %cst_26 {dimension_numbers = #tpu.dot_dimension_numbers<[1], [0], [0], [1], [0, 0, 1, 1], [], []>} : vector<8x8xf32>, vector<8x4xf32>, vector<8x4xf32> -> vector<8x4xf32>
    %74 = vector.extract_strided_slice %1 {offsets = [0, 16], sizes = [8, 4], strides = [1, 1]} : vector<8x32xf32> to vector<8x4xf32>
    %cst_27 = arith.constant 5.000000e-01 : f32
    %75 = vector.broadcast %cst_27 : f32 to vector<8x4xf32>
    %76 = arith.mulf %74, %75 : vector<8x4xf32>
    %77 = vector.extract_strided_slice %3 {offsets = [0, 16], sizes = [8, 4], strides = [1, 1]} : vector<8x32xf32> to vector<8x4xf32>
    %78 = vector.extract_strided_slice %5 {offsets = [0, 16], sizes = [8, 4], strides = [1, 1]} : vector<8x32xf32> to vector<8x4xf32>
    %cst_28 = arith.constant dense<0.000000e+00> : vector<8x8xf32>
    %79 = tpu.matmul %76, %77, %cst_28 {dimension_numbers = #tpu.dot_dimension_numbers<[1], [1], [0], [0], [0, 0, 1, 0], [], []>} : vector<8x4xf32>, vector<8x4xf32>, vector<8x8xf32> -> vector<8x8xf32>
    %cst_29 = arith.constant dense<0xFF800000> : vector<8xf32>
    %80 = vector.multi_reduction <maximumf>, %79, %cst_29 [1] : vector<8x8xf32> to vector<8xf32>
    %81 = vector.shape_cast %80 : vector<8xf32> to vector<8x1xf32>
    %82 = vector.broadcast %81 : vector<8x1xf32> to vector<8x8xf32>
    %83 = arith.subf %79, %82 : vector<8x8xf32>
    %84 = math.exp %83 : vector<8x8xf32>
    %cst_30 = arith.constant dense<0.000000e+00> : vector<8xf32>
    %85 = vector.multi_reduction <add>, %84, %cst_30 [1] : vector<8x8xf32> to vector<8xf32>
    %86 = vector.shape_cast %85 : vector<8xf32> to vector<8x1xf32>
    %87 = tpu.reciprocal %86 {approx = true} : vector<8x1xf32> -> vector<8x1xf32>
    %88 = vector.broadcast %87 : vector<8x1xf32> to vector<8x8xf32>
    %89 = arith.mulf %84, %88 : vector<8x8xf32>
    %cst_31 = arith.constant dense<0.000000e+00> : vector<8x4xf32>
    %90 = tpu.matmul %89, %78, %cst_31 {dimension_numbers = #tpu.dot_dimension_numbers<[1], [0], [0], [1], [0, 0, 1, 1], [], []>} : vector<8x8xf32>, vector<8x4xf32>, vector<8x4xf32> -> vector<8x4xf32>
    %91 = vector.extract_strided_slice %1 {offsets = [0, 20], sizes = [8, 4], strides = [1, 1]} : vector<8x32xf32> to vector<8x4xf32>
    %cst_32 = arith.constant 5.000000e-01 : f32
    %92 = vector.broadcast %cst_32 : f32 to vector<8x4xf32>
    %93 = arith.mulf %91, %92 : vector<8x4xf32>
    %94 = vector.extract_strided_slice %3 {offsets = [0, 20], sizes = [8, 4], strides = [1, 1]} : vector<8x32xf32> to vector<8x4xf32>
    %95 = vector.extract_strided_slice %5 {offsets = [0, 20], sizes = [8, 4], strides = [1, 1]} : vector<8x32xf32> to vector<8x4xf32>
    %cst_33 = arith.constant dense<0.000000e+00> : vector<8x8xf32>
    %96 = tpu.matmul %93, %94, %cst_33 {dimension_numbers = #tpu.dot_dimension_numbers<[1], [1], [0], [0], [0, 0, 1, 0], [], []>} : vector<8x4xf32>, vector<8x4xf32>, vector<8x8xf32> -> vector<8x8xf32>
    %cst_34 = arith.constant dense<0xFF800000> : vector<8xf32>
    %97 = vector.multi_reduction <maximumf>, %96, %cst_34 [1] : vector<8x8xf32> to vector<8xf32>
    %98 = vector.shape_cast %97 : vector<8xf32> to vector<8x1xf32>
    %99 = vector.broadcast %98 : vector<8x1xf32> to vector<8x8xf32>
    %100 = arith.subf %96, %99 : vector<8x8xf32>
    %101 = math.exp %100 : vector<8x8xf32>
    %cst_35 = arith.constant dense<0.000000e+00> : vector<8xf32>
    %102 = vector.multi_reduction <add>, %101, %cst_35 [1] : vector<8x8xf32> to vector<8xf32>
    %103 = vector.shape_cast %102 : vector<8xf32> to vector<8x1xf32>
    %104 = tpu.reciprocal %103 {approx = true} : vector<8x1xf32> -> vector<8x1xf32>
    %105 = vector.broadcast %104 : vector<8x1xf32> to vector<8x8xf32>
    %106 = arith.mulf %101, %105 : vector<8x8xf32>
    %cst_36 = arith.constant dense<0.000000e+00> : vector<8x4xf32>
    %107 = tpu.matmul %106, %95, %cst_36 {dimension_numbers = #tpu.dot_dimension_numbers<[1], [0], [0], [1], [0, 0, 1, 1], [], []>} : vector<8x8xf32>, vector<8x4xf32>, vector<8x4xf32> -> vector<8x4xf32>
    %108 = vector.extract_strided_slice %1 {offsets = [0, 24], sizes = [8, 4], strides = [1, 1]} : vector<8x32xf32> to vector<8x4xf32>
    %cst_37 = arith.constant 5.000000e-01 : f32
    %109 = vector.broadcast %cst_37 : f32 to vector<8x4xf32>
    %110 = arith.mulf %108, %109 : vector<8x4xf32>
    %111 = vector.extract_strided_slice %3 {offsets = [0, 24], sizes = [8, 4], strides = [1, 1]} : vector<8x32xf32> to vector<8x4xf32>
    %112 = vector.extract_strided_slice %5 {offsets = [0, 24], sizes = [8, 4], strides = [1, 1]} : vector<8x32xf32> to vector<8x4xf32>
    %cst_38 = arith.constant dense<0.000000e+00> : vector<8x8xf32>
    %113 = tpu.matmul %110, %111, %cst_38 {dimension_numbers = #tpu.dot_dimension_numbers<[1], [1], [0], [0], [0, 0, 1, 0], [], []>} : vector<8x4xf32>, vector<8x4xf32>, vector<8x8xf32> -> vector<8x8xf32>
    %cst_39 = arith.constant dense<0xFF800000> : vector<8xf32>
    %114 = vector.multi_reduction <maximumf>, %113, %cst_39 [1] : vector<8x8xf32> to vector<8xf32>
    %115 = vector.shape_cast %114 : vector<8xf32> to vector<8x1xf32>
    %116 = vector.broadcast %115 : vector<8x1xf32> to vector<8x8xf32>
    %117 = arith.subf %113, %116 : vector<8x8xf32>
    %118 = math.exp %117 : vector<8x8xf32>
    %cst_40 = arith.constant dense<0.000000e+00> : vector<8xf32>
    %119 = vector.multi_reduction <add>, %118, %cst_40 [1] : vector<8x8xf32> to vector<8xf32>
    %120 = vector.shape_cast %119 : vector<8xf32> to vector<8x1xf32>
    %121 = tpu.reciprocal %120 {approx = true} : vector<8x1xf32> -> vector<8x1xf32>
    %122 = vector.broadcast %121 : vector<8x1xf32> to vector<8x8xf32>
    %123 = arith.mulf %118, %122 : vector<8x8xf32>
    %cst_41 = arith.constant dense<0.000000e+00> : vector<8x4xf32>
    %124 = tpu.matmul %123, %112, %cst_41 {dimension_numbers = #tpu.dot_dimension_numbers<[1], [0], [0], [1], [0, 0, 1, 1], [], []>} : vector<8x8xf32>, vector<8x4xf32>, vector<8x4xf32> -> vector<8x4xf32>
    %125 = vector.extract_strided_slice %1 {offsets = [0, 28], sizes = [8, 4], strides = [1, 1]} : vector<8x32xf32> to vector<8x4xf32>
    %cst_42 = arith.constant 5.000000e-01 : f32
    %126 = vector.broadcast %cst_42 : f32 to vector<8x4xf32>
    %127 = arith.mulf %125, %126 : vector<8x4xf32>
    %128 = vector.extract_strided_slice %3 {offsets = [0, 28], sizes = [8, 4], strides = [1, 1]} : vector<8x32xf32> to vector<8x4xf32>
    %129 = vector.extract_strided_slice %5 {offsets = [0, 28], sizes = [8, 4], strides = [1, 1]} : vector<8x32xf32> to vector<8x4xf32>
    %cst_43 = arith.constant dense<0.000000e+00> : vector<8x8xf32>
    %130 = tpu.matmul %127, %128, %cst_43 {dimension_numbers = #tpu.dot_dimension_numbers<[1], [1], [0], [0], [0, 0, 1, 0], [], []>} : vector<8x4xf32>, vector<8x4xf32>, vector<8x8xf32> -> vector<8x8xf32>
    %cst_44 = arith.constant dense<0xFF800000> : vector<8xf32>
    %131 = vector.multi_reduction <maximumf>, %130, %cst_44 [1] : vector<8x8xf32> to vector<8xf32>
    %132 = vector.shape_cast %131 : vector<8xf32> to vector<8x1xf32>
    %133 = vector.broadcast %132 : vector<8x1xf32> to vector<8x8xf32>
    %134 = arith.subf %130, %133 : vector<8x8xf32>
    %135 = math.exp %134 : vector<8x8xf32>
    %cst_45 = arith.constant dense<0.000000e+00> : vector<8xf32>
    %136 = vector.multi_reduction <add>, %135, %cst_45 [1] : vector<8x8xf32> to vector<8xf32>
    %137 = vector.shape_cast %136 : vector<8xf32> to vector<8x1xf32>
    %138 = tpu.reciprocal %137 {approx = true} : vector<8x1xf32> -> vector<8x1xf32>
    %139 = vector.broadcast %138 : vector<8x1xf32> to vector<8x8xf32>
    %140 = arith.mulf %135, %139 : vector<8x8xf32>
    %cst_46 = arith.constant dense<0.000000e+00> : vector<8x4xf32>
    %141 = tpu.matmul %140, %129, %cst_46 {dimension_numbers = #tpu.dot_dimension_numbers<[1], [0], [0], [1], [0, 0, 1, 1], [], []>} : vector<8x8xf32>, vector<8x4xf32>, vector<8x4xf32> -> vector<8x4xf32>
    %142 = tpu.concatenate %22, %39, %56, %73, %90, %107, %124, %141 in 1 : vector<8x4xf32>, vector<8x4xf32>, vector<8x4xf32>, vector<8x4xf32>, vector<8x4xf32>, vector<8x4xf32>, vector<8x4xf32>, vector<8x4xf32> -> vector<8x32xf32>
    %c0_47 = arith.constant 0 : index
    %c0_48 = arith.constant 0 : index
    %c0_49 = arith.constant 0 : index
    %143 = vector.load %arg4[%c0_47, %c0_48, %c0_49] : memref<1x8x32xf32, #tpu.memory_space<vmem>>, vector<1x8x32xf32>
    %144 = vector.shape_cast %143 : vector<1x8x32xf32> to vector<8x32xf32>
    %145 = vector.shape_cast %142 : vector<8x32xf32> to vector<1x8x32xf32>
    tpu.vector_store %arg4[%c0_47, %c0_48, %c0_49], %145 {strides = array<i32>} : memref<1x8x32xf32, #tpu.memory_space<vmem>>, vector<1x8x32xf32>,
    return
  }
  func.func @transform_0(%arg0: i32) -> (i32, i32, i32) {
    %c0_i32 = arith.constant 0 : i32
    %c0_i32_0 = arith.constant 0 : i32
    %c0_i32_1 = arith.constant 0 : i32
    return %arg0, %c0_i32, %c0_i32_0 : i32, i32, i32
  }
  func.func @transform_1(%arg0: i32) -> (i32, i32, i32) {
    %c0_i32 = arith.constant 0 : i32
    %c0_i32_0 = arith.constant 0 : i32
    %c0_i32_1 = arith.constant 0 : i32
    return %arg0, %c0_i32, %c0_i32_0 : i32, i32, i32
  }
  func.func @transform_2(%arg0: i32) -> (i32, i32, i32) {
    %c0_i32 = arith.constant 0 : i32
    %c0_i32_0 = arith.constant 0 : i32
    %c0_i32_1 = arith.constant 0 : i32
    return %arg0, %c0_i32, %c0_i32_0 : i32, i32, i32
  }
  func.func @transform_3(%arg0: i32) -> (i32, i32, i32) {
    %c0_i32 = arith.constant 0 : i32
    %c0_i32_0 = arith.constant 0 : i32
    %c0_i32_1 = arith.constant 0 : i32
    return %arg0, %c0_i32, %c0_i32_0 : i32, i32, i32
  }
}

module attributes {stable_mosaic.version = 11 : i64} {
  func.func @_linear_kernel(%arg0: i32, %arg1: i32, %arg2: i32, %arg3: memref<16x32xf32, #tpu.memory_space<vmem>>, %arg4: memref<32x32xf32, #tpu.memory_space<vmem>>, %arg5: memref<1x32xf32, #tpu.memory_space<vmem>>, %arg6: memref<16x32xf32, #tpu.memory_space<vmem>>, %arg7: memref<16x32xf32, #tpu.memory_space<vmem>>) attributes {dimension_semantics = [#tpu.dimension_semantics<parallel>, #tpu.dimension_semantics<parallel>, #tpu.dimension_semantics<arbitrary>], iteration_bounds = array<i64: 1, 1, 1>, scalar_prefetch = 0 : i64, scratch_operands = 1 : i64, tpu.core_type = #tpu.core_type<tc>, window_params = [{transform_indices = @transform_0, window_bounds = array<i64: 16, 32>}, {transform_indices = @transform_1, window_bounds = array<i64: 32, 32>}, {transform_indices = @transform_2, window_bounds = array<i64: 1, 32>}, {transform_indices = @transform_3, window_bounds = array<i64: 16, 32>}]} {
    %c0_i32 = arith.constant 0 : i32
    %0 = arith.cmpi eq, %arg2, %c0_i32 : i32
    %1 = arith.extui %0 : i1 to i32
    %c0_i32_0 = arith.constant 0 : i32
    %2 = arith.cmpi ne, %1, %c0_i32_0 : i32
    scf.if %2 {
      %cst_10 = arith.constant 0.000000e+00 : f32
      %12 = vector.broadcast %cst_10 : f32 to vector<16x32xf32>
      %c0_11 = arith.constant 0 : index
      %c0_12 = arith.constant 0 : index
      %13 = vector.load %arg7[%c0_11, %c0_12] : memref<16x32xf32, #tpu.memory_space<vmem>>, vector<16x32xf32>
      tpu.vector_store %arg7[%c0_11, %c0_12], %12 {strides = array<i32>} : memref<16x32xf32, #tpu.memory_space<vmem>>, vector<16x32xf32>,
    } else {
    }
    %c0 = arith.constant 0 : index
    %c0_1 = arith.constant 0 : index
    %3 = vector.load %arg7[%c0, %c0_1] : memref<16x32xf32, #tpu.memory_space<vmem>>, vector<16x32xf32>
    %c0_2 = arith.constant 0 : index
    %c0_3 = arith.constant 0 : index
    %4 = vector.load %arg3[%c0_2, %c0_3] : memref<16x32xf32, #tpu.memory_space<vmem>>, vector<16x32xf32>
    %c0_4 = arith.constant 0 : index
    %c0_5 = arith.constant 0 : index
    %5 = vector.load %arg4[%c0_4, %c0_5] : memref<32x32xf32, #tpu.memory_space<vmem>>, vector<32x32xf32>
    %cst = arith.constant dense<0.000000e+00> : vector<16x32xf32>
    %6 = tpu.matmul %4, %5, %cst {dimension_numbers = #tpu.dot_dimension_numbers<[1], [0], [0], [1], [0, 0, 1, 1], [], []>} : vector<16x32xf32>, vector<32x32xf32>, vector<16x32xf32> -> vector<16x32xf32>
    %7 = arith.addf %3, %6 : vector<16x32xf32>
    %c0_6 = arith.constant 0 : index
    %c0_7 = arith.constant 0 : index
    %8 = vector.load %arg7[%c0_6, %c0_7] : memref<16x32xf32, #tpu.memory_space<vmem>>, vector<16x32xf32>
    tpu.vector_store %arg7[%c0_6, %c0_7], %7 {strides = array<i32>} : memref<16x32xf32, #tpu.memory_space<vmem>>, vector<16x32xf32>,
    %c0_i32_8 = arith.constant 0 : i32
    %9 = arith.cmpi eq, %arg2, %c0_i32_8 : i32
    %10 = arith.extui %9 : i1 to i32
    %c0_i32_9 = arith.constant 0 : i32
    %11 = arith.cmpi ne, %10, %c0_i32_9 : i32
    scf.if %11 {
      %c0_10 = arith.constant 0 : index
      %c0_11 = arith.constant 0 : index
      %12 = vector.load %arg7[%c0_10, %c0_11] : memref<16x32xf32, #tpu.memory_space<vmem>>, vector<16x32xf32>
      %c0_12 = arith.constant 0 : index
      %c0_13 = arith.constant 0 : index
      %13 = vector.load %arg5[%c0_12, %c0_13] : memref<1x32xf32, #tpu.memory_space<vmem>>, vector<1x32xf32>
      %14 = vector.broadcast %13 : vector<1x32xf32> to vector<16x32xf32>
      %15 = arith.addf %12, %14 : vector<16x32xf32>
      %c0_14 = arith.constant 0 : index
      %c0_15 = arith.constant 0 : index
      %16 = vector.load %arg6[%c0_14, %c0_15] : memref<16x32xf32, #tpu.memory_space<vmem>>, vector<16x32xf32>
      tpu.vector_store %arg6[%c0_14, %c0_15], %15 {strides = array<i32>} : memref<16x32xf32, #tpu.memory_space<vmem>>, vector<16x32xf32>,
    } else {
    }
    return
  }
  func.func @transform_0(%arg0: i32, %arg1: i32, %arg2: i32) -> (i32, i32) {
    %c0_i32 = arith.constant 0 : i32
    return %arg0, %arg2 : i32, i32
  }
  func.func @transform_1(%arg0: i32, %arg1: i32, %arg2: i32) -> (i32, i32) {
    %c0_i32 = arith.constant 0 : i32
    return %arg2, %arg1 : i32, i32
  }
  func.func @transform_2(%arg0: i32, %arg1: i32, %arg2: i32) -> (i32, i32) {
    %c0_i32 = arith.constant 0 : i32
    %c0_i32_0 = arith.constant 0 : i32
    return %c0_i32, %arg1 : i32, i32
  }
  func.func @transform_3(%arg0: i32, %arg1: i32, %arg2: i32) -> (i32, i32) {
    %c0_i32 = arith.constant 0 : i32
    return %arg0, %arg1 : i32, i32
  }
}

</mosaic_0001>

<llo_original>
// kernel: multi_head_attention.5
$region0: #{multi_head_attention.5}
  #allocation0 [shape = 'u32[]', space=smem, size = 0x4, offset = 0x4, fixed_abs, tag = 'smem constant byte address 0x4 - core index']
  #allocation1 [shape = 'u32[144,128]{1,0:T(1,128)}', space=vmem, size = 0x12000, scoped, tag = 'internal scratch']
  #allocation2 [shape = 'f32[16,32]{1,0:T(8,128)}', space=vmem, size = 0x2000, scoped, tag = 'scratch operand']
  %s0 = inlined_call_operand.vmem [shape: f32[16,32], index: 0, kind: input, shape index: {}]
  %s1 = inlined_call_operand.vmem [shape: f32[32,32], index: 1, kind: input, shape index: {}]
  %s2 = inlined_call_operand.vmem [shape: f32[1,32], index: 2, kind: input, shape index: {}]
  %s3 = inlined_call_operand.vmem [shape: f32[16,32], index: 3, kind: output, shape index: {}]
  %s4 = sld [smem:[#allocation0]]
  $region30: #{multi_head_attention.5} parent=0
    _
  %s6 = ssub.s32 1, %s4
  %s7 = scalar_select 0, %s6, %s4
  // Predicated region
  $region2: #{multi_head_attention.5} parent=0 // pred_check
    _
  $region3: #{multi_head_attention.5} parent=0 // pred_check_branch
    %9 = sbr.rel (0) target = $region5
  $region4: #{multi_head_attention.5} parent=0 // pred_region
    _
  $region5: #{multi_head_attention.5} parent=0 // pred_fallthru
    _
  // Predicated region
  $region6: #{multi_head_attention.5} parent=0 // pred_check
    _
  $region7: #{multi_head_attention.5} parent=0 // pred_check_branch
    %11 = sbr.rel (0) target = $region9
  $region8: #{multi_head_attention.5} parent=0 // pred_region
    _
  $region9: #{multi_head_attention.5} parent=0 // pred_fallthru
    _
  // Predicated region
  $region10: #{multi_head_attention.5} parent=0 // pred_check
    _
  $region11: #{multi_head_attention.5} parent=0 // pred_check_branch
    %13 = sbr.rel (0) target = $region13
  $region12: #{multi_head_attention.5} parent=0 // pred_region
    _
  $region13: #{multi_head_attention.5} parent=0 // pred_fallthru
    _
  %p14 = scmp.eq.s32.totalorder 0, 0
  // Predicated region
  $region14: #{multi_head_attention.5} parent=0 // pred_check
    %p15 = pneg %p14
  $region15: #{multi_head_attention.5} parent=0 // pred_check_branch
    %17 = sbr.rel (%p15) target = $region17
  $region16: #{multi_head_attention.5} parent=0 // pred_region
    %vm18 = vcmask 261120
    %19 = vst.msk [vmem:[#allocation2] sm:$0xff] %vm18, 0.0
    %20 = vst.msk [vmem:[#allocation2 + $0x8] sm:$0xff] %vm18, 0.0
  $region17: #{multi_head_attention.5} parent=0 // pred_fallthru
    _
  %v21 = vld [vmem:[#allocation2] sm:$0xff]
  %v22 = vld [vmem:[#allocation2 + $0x8] sm:$0xff]
  %v23 = vld [vmem:[%s0] sm:$0xff]
  %v24 = vld [vmem:[%s0 + $0x8] sm:$0xff]
  %v25 = vld [vmem:[%s1] sm:$0xff]
  %v26 = vld [vmem:[%s1 + $0x8] sm:$0xff]
  %v27 = vld [vmem:[%s1 + $0x10] sm:$0xff]
  %v28 = vld [vmem:[%s1 + $0x18] sm:$0xff]
  %vm29 = vcmask 261120
  %v31 = vsel %vm29, %v23, 0
  %v34 = vsel %vm29, %v24, 0
  %36 = vmatprep.subr.mxu0 0.0
  %37 = vmatpush1.msra.mxu0 0.0
  %38 = vmatprep.subr.mxu0 0.0
  %39 = vmatpush1.msra.mxu0 0.0
  %40 = vmatprep.subr.mxu0 0.0
  %41 = vmatpush1.msra.mxu0 0.0
  %42 = vmatprep.subr.mxu0 0.0
  %43 = vmatpush1.msra.mxu0 0.0
  %44 = vmatprep.subr.mxu0 0.0
  %45 = vmatpush1.msra.mxu0 0.0
  %46 = vmatprep.subr.mxu0 0.0
  %47 = vmatpush1.msra.mxu0 0.0
  %48 = vmatprep.subr.mxu0 0.0
  %49 = vmatpush1.msra.mxu0 0.0
  %50 = vmatprep.subr.mxu0 0.0
  %51 = vmatpush1.msra.mxu0 0.0
  %52 = vmatprep.subr.mxu0 0.0
  %53 = vmatpush1.msra.mxu0 0.0
  %54 = vmatprep.subr.mxu0 0.0
  %55 = vmatpush1.msra.mxu0 0.0
  %56 = vmatprep.subr.mxu0 0.0
  %57 = vmatpush1.msra.mxu0 0.0
  %58 = vmatprep.subr.mxu0 0.0
  %59 = vmatpush1.msra.mxu0 0.0
  %60 = vmatprep.subr.mxu0 0.0
  %61 = vmatpush1.msra.mxu0 %v28
  %62 = vmatprep.subr.mxu0 0.0
  %63 = vmatpush1.msra.mxu0 %v27
  %64 = vmatprep.subr.mxu0 0.0
  %65 = vmatpush1.msra.mxu0 %v26
  %66 = vmatprep.subr.mxu0 0.0
  %67 = vmatpush1.msra.mxu0 %v25
  %68 = vmatprep.subr.mxu0 0.0
  %69 = vmatpush2.msra.mxu0 0.0
  %70 = vmatprep.subr.mxu0 0.0
  %71 = vmatpush2.msra.mxu0 0.0
  %72 = vmatprep.subr.mxu0 0.0
  %73 = vmatpush2.msra.mxu0 0.0
  %74 = vmatprep.subr.mxu0 0.0
  %75 = vmatpush2.msra.mxu0 0.0
  %76 = vmatprep.subr.mxu0 0.0
  %77 = vmatpush2.msra.mxu0 0.0
  %78 = vmatprep.subr.mxu0 0.0
  %79 = vmatpush2.msra.mxu0 0.0
  %80 = vmatprep.subr.mxu0 0.0
  %81 = vmatpush2.msra.mxu0 0.0
  %82 = vmatprep.subr.mxu0 0.0
  %83 = vmatpush2.msra.mxu0 0.0
  %84 = vmatprep.subr.mxu0 0.0
  %85 = vmatpush2.msra.mxu0 0.0
  %86 = vmatprep.subr.mxu0 0.0
  %87 = vmatpush2.msra.mxu0 0.0
  %88 = vmatprep.subr.mxu0 0.0
  %89 = vmatpush2.msra.mxu0 0.0
  %90 = vmatprep.subr.mxu0 0.0
  %91 = vmatpush2.msra.mxu0 0.0
  %92 = vmatprep.subr.mxu0 0.0
  %93 = vmatpush2.msra.mxu0 0.0
  %94 = vmatprep.subr.mxu0 0.0
  %95 = vmatpush2.msra.mxu0 0.0
  %96 = vmatprep.subr.mxu0 0.0
  %97 = vmatpush2.msra.mxu0 0.0
  %98 = vmatprep.subr.mxu0 0.0
  %99 = vmatpush2.msra.mxu0 0.0
  %100 = vmatprep.mubr.f32.mxu0 0.0
  %101 = vmatmul.mubr.f32.gmra.mxu0 %v31
  %v102 = vpop.f32.mrf.mxu0
  %v103 = vadd.f32 0.0, %v102
  %v104 = vpop.f32.mrf.mxu0
  %105 = vmatprep.mubr.f32.mxu0 0.0
  %106 = vmatmul.mubr.f32.gmra.mxu0 %v34
  %v107 = vpop.f32.mrf.mxu0
  %v108 = vadd.f32 0.0, %v107
  %v109 = vpop.f32.mrf.mxu0
  %110 = vdwg.mxu0
  %v111 = vadd.f32 %v21, %v103
  %v112 = vadd.f32 %v22, %v108
  %113 = vst.msk [vmem:[#allocation2] sm:$0xff] %vm29, %v111
  %114 = vst.msk [vmem:[#allocation2 + $0x8] sm:$0xff] %vm29, %v112
  // Predicated region
  $region18: #{multi_head_attention.5} parent=0 // pred_check
    %p115 = pneg %p14
  $region19: #{multi_head_attention.5} parent=0 // pred_check_branch
    %117 = sbr.rel (%p115) target = $region21
  $region20: #{multi_head_attention.5} parent=0 // pred_region
    %v118 = vld [vmem:[#allocation2] sm:$0xff]
    %v119 = vld [vmem:[#allocation2 + $0x8] sm:$0xff]
    %v120 = vld [vmem:[%s2] sm:$0x1]
    %v122 = vlaneseq
    %v123 = vshrl.u32 %v122, 7
    %v124 = vsub.s32 0, %v123
    %v125 = vrot.slane %v120, %v124
    %v127 = vadd.f32 %v118, %v125
    %v128 = vadd.f32 %v119, %v125
    %129 = vst.msk [vmem:[%s3] sm:$0xff] %vm29, %v127
    %130 = vst.msk [vmem:[%s3 + $0x8] sm:$0xff] %vm29, %v128
  $region21: #{multi_head_attention.5} parent=0 // pred_fallthru
    _
  // Predicated region
  $region22: #{multi_head_attention.5} parent=0 // pred_check
    _
  $region23: #{multi_head_attention.5} parent=0 // pred_check_branch
    %132 = sbr.rel (0) target = $region25
  $region24: #{multi_head_attention.5} parent=0 // pred_region
    _
  $region25: #{multi_head_attention.5} parent=0 // pred_fallthru
    _
  // Predicated region
  $region26: #{multi_head_attention.5} parent=0 // pred_check
    _
  $region27: #{multi_head_attention.5} parent=0 // pred_check_branch
    %134 = sbr.rel (0) target = $region29
  $region28: #{multi_head_attention.5} parent=0 // pred_region
    _
  $region29: #{multi_head_attention.5} parent=0 // pred_fallthru
    _

// kernel: multi_head_attention.6
$region0: #{multi_head_attention.6}
  #allocation0 [shape = 'u32[]', space=smem, size = 0x4, offset = 0x4, fixed_abs, tag = 'smem constant byte address 0x4 - core index']
  #allocation1 [shape = 'u32[144,128]{1,0:T(1,128)}', space=vmem, size = 0x12000, scoped, tag = 'internal scratch']
  #allocation2 [shape = 'f32[16,32]{1,0:T(8,128)}', space=vmem, size = 0x2000, scoped, tag = 'scratch operand']
  %s0 = inlined_call_operand.vmem [shape: f32[16,32], index: 0, kind: input, shape index: {}]
  %s1 = inlined_call_operand.hbm [shape: f32[32,32], index: 1, kind: input, shape index: {}]
  %s2 = inlined_call_operand.vmem [shape: f32[1,32], index: 2, kind: input, shape index: {}]
  %s3 = inlined_call_operand.vmem [shape: f32[16,32], index: 3, kind: output, shape index: {}]
  %s4 = sld [smem:[#allocation0]]
  $region34: #{multi_head_attention.6} parent=0
    _
  %s6 = ssub.s32 1, %s4
  %s7 = scalar_select 0, %s6, %s4
  $region1: #{multi_head_attention.6} parent=0
    #allocation3 [shape = 'u8[16384]{0}', space=vmem, size = 0x4000, scoped, tag = 'input window, operand 1, single buffered']
    #allocation4 [shape = 's32[1]{0}', space=sflag, size = 0x4, scoped, tag = 'scoped memory for multi_head_attention.6']
    %8 = vsyncpa [#allocation4], 0
    // Predicated region
    $region2: #{multi_head_attention.6} parent=1 // pred_check
      _
    $region3: #{multi_head_attention.6} parent=1 // pred_check_branch
      %10 = sbr.rel (0) target = $region5
    $region4: #{multi_head_attention.6} parent=1 // pred_region
      _
    $region5: #{multi_head_attention.6} parent=1 // pred_fallthru
      _
    // Predicated region
    $region6: #{multi_head_attention.6} parent=1 // pred_check
      _
    $region7: #{multi_head_attention.6} parent=1 // pred_check_branch
      %12 = sbr.rel (0) target = $region9
    $region8: #{multi_head_attention.6} parent=1 // pred_region
      %s14 = ssub.s32 512, 512
      %15 = vsyncadd [#allocation4], %s14
      %s16 = sshll.u32 [#allocation3], 4
      %s17 = int_to_ptr.vmem [resolvable:$true] %s16
      %22 = dma.hbm_to_vmem [thread:$0]  %s1, 512, %s17, [#allocation4], 128, 128, 8
    $region9: #{multi_head_attention.6} parent=1 // pred_fallthru
      _
    // Predicated region
    $region10: #{multi_head_attention.6} parent=1 // pred_check
      _
    $region11: #{multi_head_attention.6} parent=1 // pred_check_branch
      %24 = sbr.rel (0) target = $region13
    $region12: #{multi_head_attention.6} parent=1 // pred_region
      _
    $region13: #{multi_head_attention.6} parent=1 // pred_fallthru
      _
    // Predicated region
    $region14: #{multi_head_attention.6} parent=1 // pred_check
      _
    $region15: #{multi_head_attention.6} parent=1 // pred_check_branch
      %26 = sbr.rel (0) target = $region17
    $region16: #{multi_head_attention.6} parent=1 // pred_region
      %27 = dma.done [#allocation4], 512
    $region17: #{multi_head_attention.6} parent=1 // pred_fallthru
      _
    %p28 = scmp.eq.s32.totalorder 0, 0
    // Predicated region
    $region18: #{multi_head_attention.6} parent=1 // pred_check
      %p29 = pneg %p28
    $region19: #{multi_head_attention.6} parent=1 // pred_check_branch
      %31 = sbr.rel (%p29) target = $region21
    $region20: #{multi_head_attention.6} parent=1 // pred_region
      %vm32 = vcmask 261120
      %33 = vst.msk [vmem:[#allocation2] sm:$0xff] %vm32, 0.0
      %34 = vst.msk [vmem:[#allocation2 + $0x8] sm:$0xff] %vm32, 0.0
    $region21: #{multi_head_attention.6} parent=1 // pred_fallthru
      _
    %v35 = vld [vmem:[#allocation2] sm:$0xff]
    %v36 = vld [vmem:[#allocation2 + $0x8] sm:$0xff]
    %v37 = vld [vmem:[%s0] sm:$0xff]
    %v38 = vld [vmem:[%s0 + $0x8] sm:$0xff]
    %v39 = vld [vmem:[#allocation3] sm:$0xff]
    %v40 = vld [vmem:[#allocation3 + $0x8] sm:$0xff]
    %v41 = vld [vmem:[#allocation3 + $0x10] sm:$0xff]
    %v42 = vld [vmem:[#allocation3 + $0x18] sm:$0xff]
    %vm43 = vcmask 261120
    %v45 = vsel %vm43, %v37, 0
    %v48 = vsel %vm43, %v38, 0
    %50 = vmatprep.subr.mxu0 0.0
    %51 = vmatpush1.msra.mxu0 0.0
    %52 = vmatprep.subr.mxu0 0.0
    %53 = vmatpush1.msra.mxu0 0.0
    %54 = vmatprep.subr.mxu0 0.0
    %55 = vmatpush1.msra.mxu0 0.0
    %56 = vmatprep.subr.mxu0 0.0
    %57 = vmatpush1.msra.mxu0 0.0
    %58 = vmatprep.subr.mxu0 0.0
    %59 = vmatpush1.msra.mxu0 0.0
    %60 = vmatprep.subr.mxu0 0.0
    %61 = vmatpush1.msra.mxu0 0.0
    %62 = vmatprep.subr.mxu0 0.0
    %63 = vmatpush1.msra.mxu0 0.0
    %64 = vmatprep.subr.mxu0 0.0
    %65 = vmatpush1.msra.mxu0 0.0
    %66 = vmatprep.subr.mxu0 0.0
    %67 = vmatpush1.msra.mxu0 0.0
    %68 = vmatprep.subr.mxu0 0.0
    %69 = vmatpush1.msra.mxu0 0.0
    %70 = vmatprep.subr.mxu0 0.0
    %71 = vmatpush1.msra.mxu0 0.0
    %72 = vmatprep.subr.mxu0 0.0
    %73 = vmatpush1.msra.mxu0 0.0
    %74 = vmatprep.subr.mxu0 0.0
    %75 = vmatpush1.msra.mxu0 %v42
    %76 = vmatprep.subr.mxu0 0.0
    %77 = vmatpush1.msra.mxu0 %v41
    %78 = vmatprep.subr.mxu0 0.0
    %79 = vmatpush1.msra.mxu0 %v40
    %80 = vmatprep.subr.mxu0 0.0
    %81 = vmatpush1.msra.mxu0 %v39
    %82 = vmatprep.subr.mxu0 0.0
    %83 = vmatpush2.msra.mxu0 0.0
    %84 = vmatprep.subr.mxu0 0.0
    %85 = vmatpush2.msra.mxu0 0.0
    %86 = vmatprep.subr.mxu0 0.0
    %87 = vmatpush2.msra.mxu0 0.0
    %88 = vmatprep.subr.mxu0 0.0
    %89 = vmatpush2.msra.mxu0 0.0
    %90 = vmatprep.subr.mxu0 0.0
    %91 = vmatpush2.msra.mxu0 0.0
    %92 = vmatprep.subr.mxu0 0.0
    %93 = vmatpush2.msra.mxu0 0.0
    %94 = vmatprep.subr.mxu0 0.0
    %95 = vmatpush2.msra.mxu0 0.0
    %96 = vmatprep.subr.mxu0 0.0
    %97 = vmatpush2.msra.mxu0 0.0
    %98 = vmatprep.subr.mxu0 0.0
    %99 = vmatpush2.msra.mxu0 0.0
    %100 = vmatprep.subr.mxu0 0.0
    %101 = vmatpush2.msra.mxu0 0.0
    %102 = vmatprep.subr.mxu0 0.0
    %103 = vmatpush2.msra.mxu0 0.0
    %104 = vmatprep.subr.mxu0 0.0
    %105 = vmatpush2.msra.mxu0 0.0
    %106 = vmatprep.subr.mxu0 0.0
    %107 = vmatpush2.msra.mxu0 0.0
    %108 = vmatprep.subr.mxu0 0.0
    %109 = vmatpush2.msra.mxu0 0.0
    %110 = vmatprep.subr.mxu0 0.0
    %111 = vmatpush2.msra.mxu0 0.0
    %112 = vmatprep.subr.mxu0 0.0
    %113 = vmatpush2.msra.mxu0 0.0
    %114 = vmatprep.mubr.f32.mxu0 0.0
    %115 = vmatmul.mubr.f32.gmra.mxu0 %v45
    %v116 = vpop.f32.mrf.mxu0
    %v117 = vadd.f32 0.0, %v116
    %v118 = vpop.f32.mrf.mxu0
    %119 = vmatprep.mubr.f32.mxu0 0.0
    %120 = vmatmul.mubr.f32.gmra.mxu0 %v48
    %v121 = vpop.f32.mrf.mxu0
    %v122 = vadd.f32 0.0, %v121
    %v123 = vpop.f32.mrf.mxu0
    %124 = vdwg.mxu0
    %v125 = vadd.f32 %v35, %v117
    %v126 = vadd.f32 %v36, %v122
    %127 = vst.msk [vmem:[#allocation2] sm:$0xff] %vm43, %v125
    %128 = vst.msk [vmem:[#allocation2 + $0x8] sm:$0xff] %vm43, %v126
    // Predicated region
    $region22: #{multi_head_attention.6} parent=1 // pred_check
      %p129 = pneg %p28
    $region23: #{multi_head_attention.6} parent=1 // pred_check_branch
      %131 = sbr.rel (%p129) target = $region25
    $region24: #{multi_head_attention.6} parent=1 // pred_region
      %v132 = vld [vmem:[#allocation2] sm:$0xff]
      %v133 = vld [vmem:[#allocation2 + $0x8] sm:$0xff]
      %v134 = vld [vmem:[%s2] sm:$0x1]
      %v136 = vlaneseq
      %v137 = vshrl.u32 %v136, 7
      %v138 = vsub.s32 0, %v137
      %v139 = vrot.slane %v134, %v138
      %v141 = vadd.f32 %v132, %v139
      %v142 = vadd.f32 %v133, %v139
      %143 = vst.msk [vmem:[%s3] sm:$0xff] %vm43, %v141
      %144 = vst.msk [vmem:[%s3 + $0x8] sm:$0xff] %vm43, %v142
    $region25: #{multi_head_attention.6} parent=1 // pred_fallthru
      _
    // Predicated region
    $region26: #{multi_head_attention.6} parent=1 // pred_check
      _
    $region27: #{multi_head_attention.6} parent=1 // pred_check_branch
      %146 = sbr.rel (0) target = $region29
    $region28: #{multi_head_attention.6} parent=1 // pred_region
      _
    $region29: #{multi_head_attention.6} parent=1 // pred_fallthru
      _
    // Predicated region
    $region30: #{multi_head_attention.6} parent=1 // pred_check
      _
    $region31: #{multi_head_attention.6} parent=1 // pred_check_branch
      %148 = sbr.rel (0) target = $region33
    $region32: #{multi_head_attention.6} parent=1 // pred_region
      _
    $region33: #{multi_head_attention.6} parent=1 // pred_fallthru
      _
    %149 = vsyncpa [#allocation4], 1

// kernel: multi_head_attention.9
$region0: #{multi_head_attention.9}
  #allocation0 [shape = 'u32[]', space=smem, size = 0x4, offset = 0x4, fixed_abs, tag = 'smem constant byte address 0x4 - core index']
  #allocation1 [shape = 'u32[144,128]{1,0:T(1,128)}', space=vmem, size = 0x12000, scoped, tag = 'internal scratch']
  #allocation2 [shape = 'f32[16,32]{1,0:T(8,128)}', space=vmem, size = 0x2000, scoped, tag = 'scratch operand']
  %s0 = inlined_call_operand.vmem [shape: f32[16,32], index: 0, kind: input, shape index: {}]
  %s1 = inlined_call_operand.vmem [shape: f32[32,32], index: 1, kind: input, shape index: {}]
  %s2 = inlined_call_operand.vmem [shape: f32[1,32], index: 2, kind: input, shape index: {}]
  %s3 = inlined_call_operand.hbm [shape: f32[16,32], index: 3, kind: output, shape index: {}]
  %s4 = sld [smem:[#allocation0]]
  $region30: #{multi_head_attention.9} parent=0
    _
  %s6 = ssub.s32 1, %s4
  %s7 = scalar_select 0, %s6, %s4
  $region1: #{multi_head_attention.9} parent=0
    #allocation3 [shape = 'u8[8192]{0}', space=vmem, size = 0x2000, scoped, tag = 'output window, operand 0, single buffered']
    #allocation4 [shape = 's32[1]{0}', space=sflag, size = 0x4, scoped, tag = 'scoped memory for multi_head_attention.9']
    %8 = vsyncpa [#allocation4], 0
    // Predicated region
    $region2: #{multi_head_attention.9} parent=1 // pred_check
      _
    $region3: #{multi_head_attention.9} parent=1 // pred_check_branch
      %10 = sbr.rel (0) target = $region5
    $region4: #{multi_head_attention.9} parent=1 // pred_region
      _
    $region5: #{multi_head_attention.9} parent=1 // pred_fallthru
      _
    // Predicated region
    $region6: #{multi_head_attention.9} parent=1 // pred_check
      _
    $region7: #{multi_head_attention.9} parent=1 // pred_check_branch
      %12 = sbr.rel (0) target = $region9
    $region8: #{multi_head_attention.9} parent=1 // pred_region
      _
    $region9: #{multi_head_attention.9} parent=1 // pred_fallthru
      _
    // Predicated region
    $region10: #{multi_head_attention.9} parent=1 // pred_check
      _
    $region11: #{multi_head_attention.9} parent=1 // pred_check_branch
      %14 = sbr.rel (0) target = $region13
    $region12: #{multi_head_attention.9} parent=1 // pred_region
      _
    $region13: #{multi_head_attention.9} parent=1 // pred_fallthru
      _
    %p15 = scmp.eq.s32.totalorder 0, 0
    // Predicated region
    $region14: #{multi_head_attention.9} parent=1 // pred_check
      %p16 = pneg %p15
    $region15: #{multi_head_attention.9} parent=1 // pred_check_branch
      %18 = sbr.rel (%p16) target = $region17
    $region16: #{multi_head_attention.9} parent=1 // pred_region
      %vm19 = vcmask 261120
      %20 = vst.msk [vmem:[#allocation2] sm:$0xff] %vm19, 0.0
      %21 = vst.msk [vmem:[#allocation2 + $0x8] sm:$0xff] %vm19, 0.0
    $region17: #{multi_head_attention.9} parent=1 // pred_fallthru
      _
    %v22 = vld [vmem:[#allocation2] sm:$0xff]
    %v23 = vld [vmem:[#allocation2 + $0x8] sm:$0xff]
    %v24 = vld [vmem:[%s0] sm:$0xff]
    %v25 = vld [vmem:[%s0 + $0x8] sm:$0xff]
    %v26 = vld [vmem:[%s1] sm:$0xff]
    %v27 = vld [vmem:[%s1 + $0x8] sm:$0xff]
    %v28 = vld [vmem:[%s1 + $0x10] sm:$0xff]
    %v29 = vld [vmem:[%s1 + $0x18] sm:$0xff]
    %vm30 = vcmask 261120
    %v32 = vsel %vm30, %v24, 0
    %v35 = vsel %vm30, %v25, 0
    %37 = vmatprep.subr.mxu0 0.0
    %38 = vmatpush1.msra.mxu0 0.0
    %39 = vmatprep.subr.mxu0 0.0
    %40 = vmatpush1.msra.mxu0 0.0
    %41 = vmatprep.subr.mxu0 0.0
    %42 = vmatpush1.msra.mxu0 0.0
    %43 = vmatprep.subr.mxu0 0.0
    %44 = vmatpush1.msra.mxu0 0.0
    %45 = vmatprep.subr.mxu0 0.0
    %46 = vmatpush1.msra.mxu0 0.0
    %47 = vmatprep.subr.mxu0 0.0
    %48 = vmatpush1.msra.mxu0 0.0
    %49 = vmatprep.subr.mxu0 0.0
    %50 = vmatpush1.msra.mxu0 0.0
    %51 = vmatprep.subr.mxu0 0.0
    %52 = vmatpush1.msra.mxu0 0.0
    %53 = vmatprep.subr.mxu0 0.0
    %54 = vmatpush1.msra.mxu0 0.0
    %55 = vmatprep.subr.mxu0 0.0
    %56 = vmatpush1.msra.mxu0 0.0
    %57 = vmatprep.subr.mxu0 0.0
    %58 = vmatpush1.msra.mxu0 0.0
    %59 = vmatprep.subr.mxu0 0.0
    %60 = vmatpush1.msra.mxu0 0.0
    %61 = vmatprep.subr.mxu0 0.0
    %62 = vmatpush1.msra.mxu0 %v29
    %63 = vmatprep.subr.mxu0 0.0
    %64 = vmatpush1.msra.mxu0 %v28
    %65 = vmatprep.subr.mxu0 0.0
    %66 = vmatpush1.msra.mxu0 %v27
    %67 = vmatprep.subr.mxu0 0.0
    %68 = vmatpush1.msra.mxu0 %v26
    %69 = vmatprep.subr.mxu0 0.0
    %70 = vmatpush2.msra.mxu0 0.0
    %71 = vmatprep.subr.mxu0 0.0
    %72 = vmatpush2.msra.mxu0 0.0
    %73 = vmatprep.subr.mxu0 0.0
    %74 = vmatpush2.msra.mxu0 0.0
    %75 = vmatprep.subr.mxu0 0.0
    %76 = vmatpush2.msra.mxu0 0.0
    %77 = vmatprep.subr.mxu0 0.0
    %78 = vmatpush2.msra.mxu0 0.0
    %79 = vmatprep.subr.mxu0 0.0
    %80 = vmatpush2.msra.mxu0 0.0
    %81 = vmatprep.subr.mxu0 0.0
    %82 = vmatpush2.msra.mxu0 0.0
    %83 = vmatprep.subr.mxu0 0.0
    %84 = vmatpush2.msra.mxu0 0.0
    %85 = vmatprep.subr.mxu0 0.0
    %86 = vmatpush2.msra.mxu0 0.0
    %87 = vmatprep.subr.mxu0 0.0
    %88 = vmatpush2.msra.mxu0 0.0
    %89 = vmatprep.subr.mxu0 0.0
    %90 = vmatpush2.msra.mxu0 0.0
    %91 = vmatprep.subr.mxu0 0.0
    %92 = vmatpush2.msra.mxu0 0.0
    %93 = vmatprep.subr.mxu0 0.0
    %94 = vmatpush2.msra.mxu0 0.0
    %95 = vmatprep.subr.mxu0 0.0
    %96 = vmatpush2.msra.mxu0 0.0
    %97 = vmatprep.subr.mxu0 0.0
    %98 = vmatpush2.msra.mxu0 0.0
    %99 = vmatprep.subr.mxu0 0.0
    %100 = vmatpush2.msra.mxu0 0.0
    %101 = vmatprep.mubr.f32.mxu0 0.0
    %102 = vmatmul.mubr.f32.gmra.mxu0 %v32
    %v103 = vpop.f32.mrf.mxu0
    %v104 = vadd.f32 0.0, %v103
    %v105 = vpop.f32.mrf.mxu0
    %106 = vmatprep.mubr.f32.mxu0 0.0
    %107 = vmatmul.mubr.f32.gmra.mxu0 %v35
    %v108 = vpop.f32.mrf.mxu0
    %v109 = vadd.f32 0.0, %v108
    %v110 = vpop.f32.mrf.mxu0
    %111 = vdwg.mxu0
    %v112 = vadd.f32 %v22, %v104
    %v113 = vadd.f32 %v23, %v109
    %114 = vst.msk [vmem:[#allocation2] sm:$0xff] %vm30, %v112
    %115 = vst.msk [vmem:[#allocation2 + $0x8] sm:$0xff] %vm30, %v113
    // Predicated region
    $region18: #{multi_head_attention.9} parent=1 // pred_check
      %p116 = pneg %p15
    $region19: #{multi_head_attention.9} parent=1 // pred_check_branch
      %118 = sbr.rel (%p116) target = $region21
    $region20: #{multi_head_attention.9} parent=1 // pred_region
      %v119 = vld [vmem:[#allocation2] sm:$0xff]
      %v120 = vld [vmem:[#allocation2 + $0x8] sm:$0xff]
      %v121 = vld [vmem:[%s2] sm:$0x1]
      %v123 = vlaneseq
      %v124 = vshrl.u32 %v123, 7
      %v125 = vsub.s32 0, %v124
      %v126 = vrot.slane %v121, %v125
      %v128 = vadd.f32 %v119, %v126
      %v129 = vadd.f32 %v120, %v126
      %130 = vst.msk [vmem:[#allocation3] sm:$0xff] %vm30, %v128
      %131 = vst.msk [vmem:[#allocation3 + $0x8] sm:$0xff] %vm30, %v129
    $region21: #{multi_head_attention.9} parent=1 // pred_fallthru
      _
    // Predicated region
    $region22: #{multi_head_attention.9} parent=1 // pred_check
      _
    $region23: #{multi_head_attention.9} parent=1 // pred_check_branch
      %133 = sbr.rel (0) target = $region25
    $region24: #{multi_head_attention.9} parent=1 // pred_region
      %s135 = ssub.s32 256, 256
      %136 = vsyncadd [#allocation4], %s135
      %s137 = sshll.u32 [#allocation3], 4
      %s138 = int_to_ptr.vmem [resolvable:$true] %s137
      %143 = dma.vmem_to_hbm [thread:$0]  %s138, 256, %s3, [#allocation4], 128, 128, 8
    $region25: #{multi_head_attention.9} parent=1 // pred_fallthru
      _
    // Predicated region
    $region26: #{multi_head_attention.9} parent=1 // pred_check
      _
    $region27: #{multi_head_attention.9} parent=1 // pred_check_branch
      %145 = sbr.rel (0) target = $region29
    $region28: #{multi_head_attention.9} parent=1 // pred_region
      %146 = dma.done [#allocation4], 256
    $region29: #{multi_head_attention.9} parent=1 // pred_fallthru
      _
    %147 = vsyncpa [#allocation4], 1

// kernel: multi_head_attention.8
$region0: #{multi_head_attention.8}
  #allocation0 [shape = 'u32[]', space=smem, size = 0x4, offset = 0x4, fixed_abs, tag = 'smem constant byte address 0x4 - core index']
  #allocation1 [shape = 'u32[144,128]{1,0:T(1,128)}', space=vmem, size = 0x12000, scoped, tag = 'internal scratch']
  %s0 = inlined_call_operand.vmem [shape: f32[2,8,32], index: 0, kind: input, shape index: {}]
  %s1 = inlined_call_operand.vmem [shape: f32[2,8,32], index: 1, kind: input, shape index: {}]
  %s2 = inlined_call_operand.vmem [shape: f32[2,8,32], index: 2, kind: input, shape index: {}]
  %s3 = inlined_call_operand.vmem [shape: f32[2,8,32], index: 3, kind: output, shape index: {}]
  %s4 = sld [smem:[#allocation0]]
  $region45: #{multi_head_attention.8} parent=0
    _
  %s6 = ssub.s32 1, %s4
  %s7 = scalar_select 0, %s6, %s4
  loop: start=0, step=1, limit=4
  $region2: #{multi_head_attention.8} parent=0 // loop_pre_header
    _
  $region3: #{multi_head_attention.8} parent=0 // loop_header
    %s9 = sphi 0, %s13
    %p10 = scmp.ge.s32.totalorder %s9, 4
    %s19 = sphi 0, %s21
    %s22 = sphi 0, %s19
    %s23 = sphi 0, %s22
    %s39 = sphi 0, %s23
    %s45 = sphi 0, %s47
    %s48 = sphi 0, %s45
    %s49 = sphi 0, %s48
    %s65 = sphi 0, %s49
    %s71 = sphi 0, %s73
    %s74 = sphi 0, %s71
    %s75 = sphi 0, %s74
    %s91 = sphi 0, %s75
    %s97 = sphi 0, %s99
    %s100 = sphi 0, %s97
    %s101 = sphi 0, %s100
    %s117 = sphi 0, %s101
  $region4: #{multi_head_attention.8} parent=0 // loop_header_branch
    %12 = sbr.rel (%p10) target = $region8
  $region5: #{multi_head_attention.8} parent=0 // loop_body
    %s14 = ssub.s32 %s9, 1
    %s15 = ssub.s32 %s9, 2
    %s16 = sadd.s32 %s9, 1
    %s17 = ssub.s32 %s9, %s16
    %p18 = scmp.eq.s32.totalorder %s17, 0
    %s20 = sadd.s32 %s19, 1
    %s21 = scalar_select %p18, %s19, %s20
    %p24 = pneg %p18
    %p25 = scmp.eq.s32.totalorder %s9, 1
    %p26 = por %p24, %p25
    %p27 = scmp.ne.s32.totalorder %s19, %s22
    %p28 = scmp.eq.s32.totalorder %s9, 0
    %p29 = por %p27, %p28
    %p30 = scmp.ne.s32.totalorder %s19, %s22
    %p31 = scmp.eq.s32.totalorder %s14, 1
    %p32 = por %p30, %p31
    %p33 = scmp.ne.s32.totalorder %s22, %s23
    %p34 = scmp.eq.s32.totalorder %s14, 0
    %p35 = por %p33, %p34
    %p36 = scmp.ne.s32.totalorder %s22, %s23
    %p37 = scmp.eq.s32.totalorder %s15, 1
    %p38 = por %p36, %p37
    %p40 = scmp.ne.s32.totalorder %s23, %s39
    %p41 = scmp.eq.s32.totalorder %s15, 0
    %p42 = por %p40, %p41
    %s43 = ssub.s32 %s9, %s16
    %p44 = scmp.eq.s32.totalorder %s43, 0
    %s46 = sadd.s32 %s45, 1
    %s47 = scalar_select %p44, %s45, %s46
    %p50 = pneg %p44
    %p51 = scmp.eq.s32.totalorder %s9, 1
    %p52 = por %p50, %p51
    %p53 = scmp.ne.s32.totalorder %s45, %s48
    %p54 = scmp.eq.s32.totalorder %s9, 0
    %p55 = por %p53, %p54
    %p56 = scmp.ne.s32.totalorder %s45, %s48
    %p57 = scmp.eq.s32.totalorder %s14, 1
    %p58 = por %p56, %p57
    %p59 = scmp.ne.s32.totalorder %s48, %s49
    %p60 = scmp.eq.s32.totalorder %s14, 0
    %p61 = por %p59, %p60
    %p62 = scmp.ne.s32.totalorder %s48, %s49
    %p63 = scmp.eq.s32.totalorder %s15, 1
    %p64 = por %p62, %p63
    %p66 = scmp.ne.s32.totalorder %s49, %s65
    %p67 = scmp.eq.s32.totalorder %s15, 0
    %p68 = por %p66, %p67
    %s69 = ssub.s32 %s9, %s16
    %p70 = scmp.eq.s32.totalorder %s69, 0
    %s72 = sadd.s32 %s71, 1
    %s73 = scalar_select %p70, %s71, %s72
    %p76 = pneg %p70
    %p77 = scmp.eq.s32.totalorder %s9, 1
    %p78 = por %p76, %p77
    %p79 = scmp.ne.s32.totalorder %s71, %s74
    %p80 = scmp.eq.s32.totalorder %s9, 0
    %p81 = por %p79, %p80
    %p82 = scmp.ne.s32.totalorder %s71, %s74
    %p83 = scmp.eq.s32.totalorder %s14, 1
    %p84 = por %p82, %p83
    %p85 = scmp.ne.s32.totalorder %s74, %s75
    %p86 = scmp.eq.s32.totalorder %s14, 0
    %p87 = por %p85, %p86
    %p88 = scmp.ne.s32.totalorder %s74, %s75
    %p89 = scmp.eq.s32.totalorder %s15, 1
    %p90 = por %p88, %p89
    %p92 = scmp.ne.s32.totalorder %s75, %s91
    %p93 = scmp.eq.s32.totalorder %s15, 0
    %p94 = por %p92, %p93
    %s95 = ssub.s32 %s9, %s16
    %p96 = scmp.eq.s32.totalorder %s95, 0
    %s98 = sadd.s32 %s97, 1
    %s99 = scalar_select %p96, %s97, %s98
    %p102 = pneg %p96
    %p103 = scmp.eq.s32.totalorder %s9, 1
    %p104 = por %p102, %p103
    %p105 = scmp.ne.s32.totalorder %s97, %s100
    %p106 = scmp.eq.s32.totalorder %s9, 0
    %p107 = por %p105, %p106
    %p108 = scmp.ne.s32.totalorder %s97, %s100
    %p109 = scmp.eq.s32.totalorder %s14, 1
    %p110 = por %p108, %p109
    %p111 = scmp.ne.s32.totalorder %s100, %s101
    %p112 = scmp.eq.s32.totalorder %s14, 0
    %p113 = por %p111, %p112
    %p114 = scmp.ne.s32.totalorder %s100, %s101
    %p115 = scmp.eq.s32.totalorder %s15, 1
    %p116 = por %p114, %p115
    %p118 = scmp.ne.s32.totalorder %s101, %s117
    %p119 = scmp.eq.s32.totalorder %s15, 0
    %p120 = por %p118, %p119
    %p121 = scmp.le.s32.totalorder 1, %s9
    %p122 = scmp.lt.s32.totalorder %s9, 3
    %p123 = pnand %p121, %p122
    %p124 = pneg %p123
    // Predicated region
    $region9: #{multi_head_attention.8} parent=5 // pred_check
      _
    $region10: #{multi_head_attention.8} parent=5 // pred_check_branch
      %126 = sbr.rel (%p123) target = $region12
    $region11: #{multi_head_attention.8} parent=5 // pred_region
      %s127 = ssub.s32 %s9, 1
    $region12: #{multi_head_attention.8} parent=5 // pred_fallthru
      _
    %p128 = scmp.lt.s32.totalorder %s9, 2
    // Predicated region
    $region13: #{multi_head_attention.8} parent=5 // pred_check
      %p129 = pneg %p128
    $region14: #{multi_head_attention.8} parent=5 // pred_check_branch
      %131 = sbr.rel (%p129) target = $region16
    $region15: #{multi_head_attention.8} parent=5 // pred_region
      // Predicated region
      $region17: #{multi_head_attention.8} parent=15 // pred_check
        %p132 = pneg %p29
      $region18: #{multi_head_attention.8} parent=15 // pred_check_branch
        %134 = sbr.rel (%p132) target = $region20
      $region19: #{multi_head_attention.8} parent=15 // pred_region
        %p135 = scmp.lt.s32.totalorder %s9, 1
        %s136 = scalar_select %p135, %s9, 1
        %s137 = smul.addr %s136, 8
        %s138 = scalar_lea.vmem %s0, %s137
      $region20: #{multi_head_attention.8} parent=15 // pred_fallthru
        _
      // Predicated region
      $region21: #{multi_head_attention.8} parent=15 // pred_check
        %p139 = pneg %p55
      $region22: #{multi_head_attention.8} parent=15 // pred_check_branch
        %141 = sbr.rel (%p139) target = $region24
      $region23: #{multi_head_attention.8} parent=15 // pred_region
        %p142 = scmp.lt.s32.totalorder %s9, 1
        %s143 = scalar_select %p142, %s9, 1
        %s144 = smul.addr %s143, 8
        %s145 = scalar_lea.vmem %s1, %s144
      $region24: #{multi_head_attention.8} parent=15 // pred_fallthru
        _
      // Predicated region
      $region25: #{multi_head_attention.8} parent=15 // pred_check
        %p146 = pneg %p81
      $region26: #{multi_head_attention.8} parent=15 // pred_check_branch
        %148 = sbr.rel (%p146) target = $region28
      $region27: #{multi_head_attention.8} parent=15 // pred_region
        %p149 = scmp.lt.s32.totalorder %s9, 1
        %s150 = scalar_select %p149, %s9, 1
        %s151 = smul.addr %s150, 8
        %s152 = scalar_lea.vmem %s2, %s151
      $region28: #{multi_head_attention.8} parent=15 // pred_fallthru
        _
    $region16: #{multi_head_attention.8} parent=5 // pred_fallthru
      _
    %p153 = scmp.le.s32.totalorder 1, %s9
    %p154 = scmp.lt.s32.totalorder %s9, 3
    %p155 = pnand %p153, %p154
    %p156 = pneg %p155
    // Predicated region
    $region29: #{multi_head_attention.8} parent=5 // pred_check
      _
    $region30: #{multi_head_attention.8} parent=5 // pred_check_branch
      %158 = sbr.rel (%p155) target = $region32
    $region31: #{multi_head_attention.8} parent=5 // pred_region
      %s159 = ssub.s32 %s9, 1
      %p160 = scmp.lt.s32.totalorder %s14, 1
      %s161 = scalar_select %p160, %s14, 1
      %s162 = smul.addr %s161, 8
      %s163 = scalar_lea.vmem %s0, %s162
      %p164 = pneg %p35
      %p165 = pneg %p32
      %p166 = scmp.lt.s32.totalorder %s14, 1
      %s167 = scalar_select %p166, %s14, 1
      %s168 = smul.addr %s167, 8
      %s169 = scalar_lea.vmem %s1, %s168
      %p170 = pneg %p61
      %p171 = pneg %p58
      %p172 = scmp.lt.s32.totalorder %s14, 1
      %s173 = scalar_select %p172, %s14, 1
      %s174 = smul.addr %s173, 8
      %s175 = scalar_lea.vmem %s2, %s174
      %p176 = pneg %p87
      %p177 = pneg %p84
      %p178 = pneg %p113
      %p179 = pneg %p110
      %p180 = scmp.lt.s32.totalorder %s14, 1
      %s181 = scalar_select %p180, %s14, 1
      %s182 = smul.addr %s181, 8
      %s183 = scalar_lea.vmem %s3, %s182
      %p184 = scmp.lt.s32.totalorder %s14, 1
      %s185 = scalar_select %p184, %s14, 1
      %s186 = smul.addr %s185, 8
      %s187 = scalar_lea.vmem %s0, %s186
      %p188 = scmp.lt.s32.totalorder %s14, 1
      %s189 = scalar_select %p188, %s14, 1
      %s190 = smul.addr %s189, 8
      %s191 = scalar_lea.vmem %s1, %s190
      %p192 = scmp.lt.s32.totalorder %s14, 1
      %s193 = scalar_select %p192, %s14, 1
      %s194 = smul.addr %s193, 8
      %s195 = scalar_lea.vmem %s2, %s194
      %p196 = scmp.lt.s32.totalorder %s14, 1
      %s197 = scalar_select %p196, %s14, 1
      %s198 = smul.addr %s197, 8
      %s199 = scalar_lea.vmem %s3, %s198
      %v200 = vld [vmem:[%s187] sm:$0xff]
      %v201 = vld [vmem:[%s191] sm:$0xff]
      %v202 = vld [vmem:[%s195] sm:$0xff]
      %v203 = vmul.f32 %v200, 0.5
      %vm204 = vcmask 31744
      %v206 = vsel %vm204, %v203, 0
      %v209 = vsel %vm204, %v201, 0
      %211 = vmatprep.subr.mxu0 0.0
      %212 = vmatpush1.xpose.msra.mxu0 0.0
      %213 = vmatprep.subr.mxu0 0.0
      %214 = vmatpush1.xpose.msra.mxu0 0.0
      %215 = vmatprep.subr.mxu0 0.0
      %216 = vmatpush1.xpose.msra.mxu0 0.0
      %217 = vmatprep.subr.mxu0 0.0
      %218 = vmatpush1.xpose.msra.mxu0 0.0
      %219 = vmatprep.subr.mxu0 0.0
      %220 = vmatpush1.xpose.msra.mxu0 0.0
      %221 = vmatprep.subr.mxu0 0.0
      %222 = vmatpush1.xpose.msra.mxu0 0.0
      %223 = vmatprep.subr.mxu0 0.0
      %224 = vmatpush1.xpose.msra.mxu0 0.0
      %225 = vmatprep.subr.mxu0 0.0
      %226 = vmatpush1.xpose.msra.mxu0 0.0
      %227 = vmatprep.subr.mxu0 0.0
      %228 = vmatpush1.xpose.msra.mxu0 0.0
      %229 = vmatprep.subr.mxu0 0.0
      %230 = vmatpush1.xpose.msra.mxu0 0.0
      %231 = vmatprep.subr.mxu0 0.0
      %232 = vmatpush1.xpose.msra.mxu0 0.0
      %233 = vmatprep.subr.mxu0 0.0
      %234 = vmatpush1.xpose.msra.mxu0 0.0
      %235 = vmatprep.subr.mxu0 0.0
      %236 = vmatpush1.xpose.msra.mxu0 0.0
      %237 = vmatprep.subr.mxu0 0.0
      %238 = vmatpush1.xpose.msra.mxu0 0.0
      %239 = vmatprep.subr.mxu0 0.0
      %240 = vmatpush1.xpose.msra.mxu0 0.0
      %241 = vmatprep.subr.mxu0 0.0
      %242 = vmatpush1.xpose.msra.mxu0 %v209
      %243 = vmatprep.subr.mxu0 0.0
      %244 = vmatpush2.xpose.msra.mxu0 0.0
      %245 = vmatprep.subr.mxu0 0.0
      %246 = vmatpush2.xpose.msra.mxu0 0.0
      %247 = vmatprep.subr.mxu0 0.0
      %248 = vmatpush2.xpose.msra.mxu0 0.0
      %249 = vmatprep.subr.mxu0 0.0
      %250 = vmatpush2.xpose.msra.mxu0 0.0
      %251 = vmatprep.subr.mxu0 0.0
      %252 = vmatpush2.xpose.msra.mxu0 0.0
      %253 = vmatprep.subr.mxu0 0.0
      %254 = vmatpush2.xpose.msra.mxu0 0.0
      %255 = vmatprep.subr.mxu0 0.0
      %256 = vmatpush2.xpose.msra.mxu0 0.0
      %257 = vmatprep.subr.mxu0 0.0
      %258 = vmatpush2.xpose.msra.mxu0 0.0
      %259 = vmatprep.subr.mxu0 0.0
      %260 = vmatpush2.xpose.msra.mxu0 0.0
      %261 = vmatprep.subr.mxu0 0.0
      %262 = vmatpush2.xpose.msra.mxu0 0.0
      %263 = vmatprep.subr.mxu0 0.0
      %264 = vmatpush2.xpose.msra.mxu0 0.0
      %265 = vmatprep.subr.mxu0 0.0
      %266 = vmatpush2.xpose.msra.mxu0 0.0
      %267 = vmatprep.subr.mxu0 0.0
      %268 = vmatpush2.xpose.msra.mxu0 0.0
      %269 = vmatprep.subr.mxu0 0.0
      %270 = vmatpush2.xpose.msra.mxu0 0.0
      %271 = vmatprep.subr.mxu0 0.0
      %272 = vmatpush2.xpose.msra.mxu0 0.0
      %273 = vmatprep.subr.mxu0 0.0
      %274 = vmatpush2.xpose.msra.mxu0 0.0
      %275 = vmatprep.mubr.f32.mxu0 0.0
      %276 = vmatmul.mubr.f32.gmra.mxu0 %v206
      %v277 = vpop.f32.mrf.mxu0
      %v278 = vadd.f32 0.0, %v277
      %v279 = vpop.f32.mrf.mxu0
      %280 = vdwg.mxu0
      %vm281 = vcmask 64512
      %v282 = vsel %vm281, %v278, -inf
      %283 = vmax.xlane.f32.xlu0 %v282
      %v284 = vpop.xlane.xlu0 %283
      %v285 = vsub.f32 %v278, %v284
      %v286 = vmul.f32 %v285, 1.442695
      %v287 = vpow.pop %v286
      %v288 = vsel %vm281, %v287, 0.0
      %289 = vadd.xlane.f32.xlu0 %v288
      %v290 = vpop.xlane.xlu0 %289
      %v291 = vrcp.pop %v290
      %v292 = vmul.f32 %v287, %v291
      %v294 = vsel %vm281, %v292, 0
      %296 = vmatprep.subr.mxu0 0.0
      %297 = vmatpush1.msra.mxu0 0.0
      %298 = vmatprep.subr.mxu0 0.0
      %299 = vmatpush1.msra.mxu0 0.0
      %300 = vmatprep.subr.mxu0 0.0
      %301 = vmatpush1.msra.mxu0 0.0
      %302 = vmatprep.subr.mxu0 0.0
      %303 = vmatpush1.msra.mxu0 0.0
      %304 = vmatprep.subr.mxu0 0.0
      %305 = vmatpush1.msra.mxu0 0.0
      %306 = vmatprep.subr.mxu0 0.0
      %307 = vmatpush1.msra.mxu0 0.0
      %308 = vmatprep.subr.mxu0 0.0
      %309 = vmatpush1.msra.mxu0 0.0
      %310 = vmatprep.subr.mxu0 0.0
      %311 = vmatpush1.msra.mxu0 0.0
      %312 = vmatprep.subr.mxu0 0.0
      %313 = vmatpush1.msra.mxu0 0.0
      %314 = vmatprep.subr.mxu0 0.0
      %315 = vmatpush1.msra.mxu0 0.0
      %316 = vmatprep.subr.mxu0 0.0
      %317 = vmatpush1.msra.mxu0 0.0
      %318 = vmatprep.subr.mxu0 0.0
      %319 = vmatpush1.msra.mxu0 0.0
      %320 = vmatprep.subr.mxu0 0.0
      %321 = vmatpush1.msra.mxu0 0.0
      %322 = vmatprep.subr.mxu0 0.0
      %323 = vmatpush1.msra.mxu0 0.0
      %324 = vmatprep.subr.mxu0 0.0
      %325 = vmatpush1.msra.mxu0 0.0
      %326 = vmatprep.subr.mxu0 0.0
      %327 = vmatpush1.msra.mxu0 %v202
      %328 = vmatprep.subr.mxu0 0.0
      %329 = vmatpush2.msra.mxu0 0.0
      %330 = vmatprep.subr.mxu0 0.0
      %331 = vmatpush2.msra.mxu0 0.0
      %332 = vmatprep.subr.mxu0 0.0
      %333 = vmatpush2.msra.mxu0 0.0
      %334 = vmatprep.subr.mxu0 0.0
      %335 = vmatpush2.msra.mxu0 0.0
      %336 = vmatprep.subr.mxu0 0.0
      %337 = vmatpush2.msra.mxu0 0.0
      %338 = vmatprep.subr.mxu0 0.0
      %339 = vmatpush2.msra.mxu0 0.0
      %340 = vmatprep.subr.mxu0 0.0
      %341 = vmatpush2.msra.mxu0 0.0
      %342 = vmatprep.subr.mxu0 0.0
      %343 = vmatpush2.msra.mxu0 0.0
      %344 = vmatprep.subr.mxu0 0.0
      %345 = vmatpush2.msra.mxu0 0.0
      %346 = vmatprep.subr.mxu0 0.0
      %347 = vmatpush2.msra.mxu0 0.0
      %348 = vmatprep.subr.mxu0 0.0
      %349 = vmatpush2.msra.mxu0 0.0
      %350 = vmatprep.subr.mxu0 0.0
      %351 = vmatpush2.msra.mxu0 0.0
      %352 = vmatprep.subr.mxu0 0.0
      %353 = vmatpush2.msra.mxu0 0.0
      %354 = vmatprep.subr.mxu0 0.0
      %355 = vmatpush2.msra.mxu0 0.0
      %356 = vmatprep.subr.mxu0 0.0
      %357 = vmatpush2.msra.mxu0 0.0
      %358 = vmatprep.subr.mxu0 0.0
      %359 = vmatpush2.msra.mxu0 0.0
      %360 = vmatprep.mubr.f32.mxu0 0.0
      %361 = vmatmul.mubr.f32.gmra.mxu0 %v294
      %v362 = vpop.f32.mrf.mxu0
      %v363 = vadd.f32 0.0, %v362
      %v364 = vpop.f32.mrf.mxu0
      %365 = vdwg.mxu0
      %366 = vrot.lane.b32.xlu0 %v203, 124
      %v367 = vpop.permute.xlu0 %366
      %368 = vrot.lane.b32.xlu0 %v201, 124
      %v369 = vpop.permute.xlu0 %368
      %v370 = vsel %vm204, %v367, 0
      %v372 = vsel %vm204, %v369, 0
      %374 = vmatprep.subr.mxu0 0.0
      %375 = vmatpush1.xpose.msra.mxu0 0.0
      %376 = vmatprep.subr.mxu0 0.0
      %377 = vmatpush1.xpose.msra.mxu0 0.0
      %378 = vmatprep.subr.mxu0 0.0
      %379 = vmatpush1.xpose.msra.mxu0 0.0
      %380 = vmatprep.subr.mxu0 0.0
      %381 = vmatpush1.xpose.msra.mxu0 0.0
      %382 = vmatprep.subr.mxu0 0.0
      %383 = vmatpush1.xpose.msra.mxu0 0.0
      %384 = vmatprep.subr.mxu0 0.0
      %385 = vmatpush1.xpose.msra.mxu0 0.0
      %386 = vmatprep.subr.mxu0 0.0
      %387 = vmatpush1.xpose.msra.mxu0 0.0
      %388 = vmatprep.subr.mxu0 0.0
      %389 = vmatpush1.xpose.msra.mxu0 0.0
      %390 = vmatprep.subr.mxu0 0.0
      %391 = vmatpush1.xpose.msra.mxu0 0.0
      %392 = vmatprep.subr.mxu0 0.0
      %393 = vmatpush1.xpose.msra.mxu0 0.0
      %394 = vmatprep.subr.mxu0 0.0
      %395 = vmatpush1.xpose.msra.mxu0 0.0
      %396 = vmatprep.subr.mxu0 0.0
      %397 = vmatpush1.xpose.msra.mxu0 0.0
      %398 = vmatprep.subr.mxu0 0.0
      %399 = vmatpush1.xpose.msra.mxu0 0.0
      %400 = vmatprep.subr.mxu0 0.0
      %401 = vmatpush1.xpose.msra.mxu0 0.0
      %402 = vmatprep.subr.mxu0 0.0
      %403 = vmatpush1.xpose.msra.mxu0 0.0
      %404 = vmatprep.subr.mxu0 0.0
      %405 = vmatpush1.xpose.msra.mxu0 %v372
      %406 = vmatprep.subr.mxu0 0.0
      %407 = vmatpush2.xpose.msra.mxu0 0.0
      %408 = vmatprep.subr.mxu0 0.0
      %409 = vmatpush2.xpose.msra.mxu0 0.0
      %410 = vmatprep.subr.mxu0 0.0
      %411 = vmatpush2.xpose.msra.mxu0 0.0
      %412 = vmatprep.subr.mxu0 0.0
      %413 = vmatpush2.xpose.msra.mxu0 0.0
      %414 = vmatprep.subr.mxu0 0.0
      %415 = vmatpush2.xpose.msra.mxu0 0.0
      %416 = vmatprep.subr.mxu0 0.0
      %417 = vmatpush2.xpose.msra.mxu0 0.0
      %418 = vmatprep.subr.mxu0 0.0
      %419 = vmatpush2.xpose.msra.mxu0 0.0
      %420 = vmatprep.subr.mxu0 0.0
      %421 = vmatpush2.xpose.msra.mxu0 0.0
      %422 = vmatprep.subr.mxu0 0.0
      %423 = vmatpush2.xpose.msra.mxu0 0.0
      %424 = vmatprep.subr.mxu0 0.0
      %425 = vmatpush2.xpose.msra.mxu0 0.0
      %426 = vmatprep.subr.mxu0 0.0
      %427 = vmatpush2.xpose.msra.mxu0 0.0
      %428 = vmatprep.subr.mxu0 0.0
      %429 = vmatpush2.xpose.msra.mxu0 0.0
      %430 = vmatprep.subr.mxu0 0.0
      %431 = vmatpush2.xpose.msra.mxu0 0.0
      %432 = vmatprep.subr.mxu0 0.0
      %433 = vmatpush2.xpose.msra.mxu0 0.0
      %434 = vmatprep.subr.mxu0 0.0
      %435 = vmatpush2.xpose.msra.mxu0 0.0
      %436 = vmatprep.subr.mxu0 0.0
      %437 = vmatpush2.xpose.msra.mxu0 0.0
      %438 = vmatprep.mubr.f32.mxu0 0.0
      %439 = vmatmul.mubr.f32.gmra.mxu0 %v370
      %v440 = vpop.f32.mrf.mxu0
      %v441 = vadd.f32 0.0, %v440
      %v442 = vpop.f32.mrf.mxu0
      %443 = vdwg.mxu0
      %v444 = vsel %vm281, %v441, -inf
      %445 = vmax.xlane.f32.xlu0 %v444
      %v446 = vpop.xlane.xlu0 %445
      %v447 = vsub.f32 %v441, %v446
      %v448 = vmul.f32 %v447, 1.442695
      %v449 = vpow.pop %v448
      %v450 = vsel %vm281, %v449, 0.0
      %451 = vadd.xlane.f32.xlu0 %v450
      %v452 = vpop.xlane.xlu0 %451
      %v453 = vrcp.pop %v452
      %v454 = vmul.f32 %v449, %v453
      %456 = vrot.lane.b32.xlu0 %v202, 124
      %v457 = vpop.permute.xlu0 %456
      %v460 = vsel %vm281, %v454, 0
      %462 = vmatprep.subr.mxu0 0.0
      %463 = vmatpush1.msra.mxu0 0.0
      %464 = vmatprep.subr.mxu0 0.0
      %465 = vmatpush1.msra.mxu0 0.0
      %466 = vmatprep.subr.mxu0 0.0
      %467 = vmatpush1.msra.mxu0 0.0
      %468 = vmatprep.subr.mxu0 0.0
      %469 = vmatpush1.msra.mxu0 0.0
      %470 = vmatprep.subr.mxu0 0.0
      %471 = vmatpush1.msra.mxu0 0.0
      %472 = vmatprep.subr.mxu0 0.0
      %473 = vmatpush1.msra.mxu0 0.0
      %474 = vmatprep.subr.mxu0 0.0
      %475 = vmatpush1.msra.mxu0 0.0
      %476 = vmatprep.subr.mxu0 0.0
      %477 = vmatpush1.msra.mxu0 0.0
      %478 = vmatprep.subr.mxu0 0.0
      %479 = vmatpush1.msra.mxu0 0.0
      %480 = vmatprep.subr.mxu0 0.0
      %481 = vmatpush1.msra.mxu0 0.0
      %482 = vmatprep.subr.mxu0 0.0
      %483 = vmatpush1.msra.mxu0 0.0
      %484 = vmatprep.subr.mxu0 0.0
      %485 = vmatpush1.msra.mxu0 0.0
      %486 = vmatprep.subr.mxu0 0.0
      %487 = vmatpush1.msra.mxu0 0.0
      %488 = vmatprep.subr.mxu0 0.0
      %489 = vmatpush1.msra.mxu0 0.0
      %490 = vmatprep.subr.mxu0 0.0
      %491 = vmatpush1.msra.mxu0 0.0
      %492 = vmatprep.subr.mxu0 0.0
      %493 = vmatpush1.msra.mxu0 %v457
      %494 = vmatprep.subr.mxu0 0.0
      %495 = vmatpush2.msra.mxu0 0.0
      %496 = vmatprep.subr.mxu0 0.0
      %497 = vmatpush2.msra.mxu0 0.0
      %498 = vmatprep.subr.mxu0 0.0
      %499 = vmatpush2.msra.mxu0 0.0
      %500 = vmatprep.subr.mxu0 0.0
      %501 = vmatpush2.msra.mxu0 0.0
      %502 = vmatprep.subr.mxu0 0.0
      %503 = vmatpush2.msra.mxu0 0.0
      %504 = vmatprep.subr.mxu0 0.0
      %505 = vmatpush2.msra.mxu0 0.0
      %506 = vmatprep.subr.mxu0 0.0
      %507 = vmatpush2.msra.mxu0 0.0
      %508 = vmatprep.subr.mxu0 0.0
      %509 = vmatpush2.msra.mxu0 0.0
      %510 = vmatprep.subr.mxu0 0.0
      %511 = vmatpush2.msra.mxu0 0.0
      %512 = vmatprep.subr.mxu0 0.0
      %513 = vmatpush2.msra.mxu0 0.0
      %514 = vmatprep.subr.mxu0 0.0
      %515 = vmatpush2.msra.mxu0 0.0
      %516 = vmatprep.subr.mxu0 0.0
      %517 = vmatpush2.msra.mxu0 0.0
      %518 = vmatprep.subr.mxu0 0.0
      %519 = vmatpush2.msra.mxu0 0.0
      %520 = vmatprep.subr.mxu0 0.0
      %521 = vmatpush2.msra.mxu0 0.0
      %522 = vmatprep.subr.mxu0 0.0
      %523 = vmatpush2.msra.mxu0 0.0
      %524 = vmatprep.subr.mxu0 0.0
      %525 = vmatpush2.msra.mxu0 0.0
      %526 = vmatprep.mubr.f32.mxu0 0.0
      %527 = vmatmul.mubr.f32.gmra.mxu0 %v460
      %v528 = vpop.f32.mrf.mxu0
      %v529 = vadd.f32 0.0, %v528
      %v530 = vpop.f32.mrf.mxu0
      %531 = vdwg.mxu0
      %532 = vrot.lane.b32.xlu0 %v203, 120
      %v533 = vpop.permute.xlu0 %532
      %534 = vrot.lane.b32.xlu0 %v201, 120
      %v535 = vpop.permute.xlu0 %534
      %v536 = vsel %vm204, %v533, 0
      %v538 = vsel %vm204, %v535, 0
      %540 = vmatprep.subr.mxu0 0.0
      %541 = vmatpush1.xpose.msra.mxu0 0.0
      %542 = vmatprep.subr.mxu0 0.0
      %543 = vmatpush1.xpose.msra.mxu0 0.0
      %544 = vmatprep.subr.mxu0 0.0
      %545 = vmatpush1.xpose.msra.mxu0 0.0
      %546 = vmatprep.subr.mxu0 0.0
      %547 = vmatpush1.xpose.msra.mxu0 0.0
      %548 = vmatprep.subr.mxu0 0.0
      %549 = vmatpush1.xpose.msra.mxu0 0.0
      %550 = vmatprep.subr.mxu0 0.0
      %551 = vmatpush1.xpose.msra.mxu0 0.0
      %552 = vmatprep.subr.mxu0 0.0
      %553 = vmatpush1.xpose.msra.mxu0 0.0
      %554 = vmatprep.subr.mxu0 0.0
      %555 = vmatpush1.xpose.msra.mxu0 0.0
      %556 = vmatprep.subr.mxu0 0.0
      %557 = vmatpush1.xpose.msra.mxu0 0.0
      %558 = vmatprep.subr.mxu0 0.0
      %559 = vmatpush1.xpose.msra.mxu0 0.0
      %560 = vmatprep.subr.mxu0 0.0
      %561 = vmatpush1.xpose.msra.mxu0 0.0
      %562 = vmatprep.subr.mxu0 0.0
      %563 = vmatpush1.xpose.msra.mxu0 0.0
      %564 = vmatprep.subr.mxu0 0.0
      %565 = vmatpush1.xpose.msra.mxu0 0.0
      %566 = vmatprep.subr.mxu0 0.0
      %567 = vmatpush1.xpose.msra.mxu0 0.0
      %568 = vmatprep.subr.mxu0 0.0
      %569 = vmatpush1.xpose.msra.mxu0 0.0
      %570 = vmatprep.subr.mxu0 0.0
      %571 = vmatpush1.xpose.msra.mxu0 %v538
      %572 = vmatprep.subr.mxu0 0.0
      %573 = vmatpush2.xpose.msra.mxu0 0.0
      %574 = vmatprep.subr.mxu0 0.0
      %575 = vmatpush2.xpose.msra.mxu0 0.0
      %576 = vmatprep.subr.mxu0 0.0
      %577 = vmatpush2.xpose.msra.mxu0 0.0
      %578 = vmatprep.subr.mxu0 0.0
      %579 = vmatpush2.xpose.msra.mxu0 0.0
      %580 = vmatprep.subr.mxu0 0.0
      %581 = vmatpush2.xpose.msra.mxu0 0.0
      %582 = vmatprep.subr.mxu0 0.0
      %583 = vmatpush2.xpose.msra.mxu0 0.0
      %584 = vmatprep.subr.mxu0 0.0
      %585 = vmatpush2.xpose.msra.mxu0 0.0
      %586 = vmatprep.subr.mxu0 0.0
      %587 = vmatpush2.xpose.msra.mxu0 0.0
      %588 = vmatprep.subr.mxu0 0.0
      %589 = vmatpush2.xpose.msra.mxu0 0.0
      %590 = vmatprep.subr.mxu0 0.0
      %591 = vmatpush2.xpose.msra.mxu0 0.0
      %592 = vmatprep.subr.mxu0 0.0
      %593 = vmatpush2.xpose.msra.mxu0 0.0
      %594 = vmatprep.subr.mxu0 0.0
      %595 = vmatpush2.xpose.msra.mxu0 0.0
      %596 = vmatprep.subr.mxu0 0.0
      %597 = vmatpush2.xpose.msra.mxu0 0.0
      %598 = vmatprep.subr.mxu0 0.0
      %599 = vmatpush2.xpose.msra.mxu0 0.0
      %600 = vmatprep.subr.mxu0 0.0
      %601 = vmatpush2.xpose.msra.mxu0 0.0
      %602 = vmatprep.subr.mxu0 0.0
      %603 = vmatpush2.xpose.msra.mxu0 0.0
      %604 = vmatprep.mubr.f32.mxu0 0.0
      %605 = vmatmul.mubr.f32.gmra.mxu0 %v536
      %v606 = vpop.f32.mrf.mxu0
      %v607 = vadd.f32 0.0, %v606
      %v608 = vpop.f32.mrf.mxu0
      %609 = vdwg.mxu0
      %v610 = vsel %vm281, %v607, -inf
      %611 = vmax.xlane.f32.xlu0 %v610
      %v612 = vpop.xlane.xlu0 %611
      %v613 = vsub.f32 %v607, %v612
      %v614 = vmul.f32 %v613, 1.442695
      %v615 = vpow.pop %v614
      %v616 = vsel %vm281, %v615, 0.0
      %617 = vadd.xlane.f32.xlu0 %v616
      %v618 = vpop.xlane.xlu0 %617
      %v619 = vrcp.pop %v618
      %v620 = vmul.f32 %v615, %v619
      %621 = vrot.lane.b32.xlu0 %v202, 120
      %v622 = vpop.permute.xlu0 %621
      %v625 = vsel %vm281, %v620, 0
      %627 = vmatprep.subr.mxu0 0.0
      %628 = vmatpush1.msra.mxu0 0.0
      %629 = vmatprep.subr.mxu0 0.0
      %630 = vmatpush1.msra.mxu0 0.0
      %631 = vmatprep.subr.mxu0 0.0
      %632 = vmatpush1.msra.mxu0 0.0
      %633 = vmatprep.subr.mxu0 0.0
      %634 = vmatpush1.msra.mxu0 0.0
      %635 = vmatprep.subr.mxu0 0.0
      %636 = vmatpush1.msra.mxu0 0.0
      %637 = vmatprep.subr.mxu0 0.0
      %638 = vmatpush1.msra.mxu0 0.0
      %639 = vmatprep.subr.mxu0 0.0
      %640 = vmatpush1.msra.mxu0 0.0
      %641 = vmatprep.subr.mxu0 0.0
      %642 = vmatpush1.msra.mxu0 0.0
      %643 = vmatprep.subr.mxu0 0.0
      %644 = vmatpush1.msra.mxu0 0.0
      %645 = vmatprep.subr.mxu0 0.0
      %646 = vmatpush1.msra.mxu0 0.0
      %647 = vmatprep.subr.mxu0 0.0
      %648 = vmatpush1.msra.mxu0 0.0
      %649 = vmatprep.subr.mxu0 0.0
      %650 = vmatpush1.msra.mxu0 0.0
      %651 = vmatprep.subr.mxu0 0.0
      %652 = vmatpush1.msra.mxu0 0.0
      %653 = vmatprep.subr.mxu0 0.0
      %654 = vmatpush1.msra.mxu0 0.0
      %655 = vmatprep.subr.mxu0 0.0
      %656 = vmatpush1.msra.mxu0 0.0
      %657 = vmatprep.subr.mxu0 0.0
      %658 = vmatpush1.msra.mxu0 %v622
      %659 = vmatprep.subr.mxu0 0.0
      %660 = vmatpush2.msra.mxu0 0.0
      %661 = vmatprep.subr.mxu0 0.0
      %662 = vmatpush2.msra.mxu0 0.0
      %663 = vmatprep.subr.mxu0 0.0
      %664 = vmatpush2.msra.mxu0 0.0
      %665 = vmatprep.subr.mxu0 0.0
      %666 = vmatpush2.msra.mxu0 0.0
      %667 = vmatprep.subr.mxu0 0.0
      %668 = vmatpush2.msra.mxu0 0.0
      %669 = vmatprep.subr.mxu0 0.0
      %670 = vmatpush2.msra.mxu0 0.0
      %671 = vmatprep.subr.mxu0 0.0
      %672 = vmatpush2.msra.mxu0 0.0
      %673 = vmatprep.subr.mxu0 0.0
      %674 = vmatpush2.msra.mxu0 0.0
      %675 = vmatprep.subr.mxu0 0.0
      %676 = vmatpush2.msra.mxu0 0.0
      %677 = vmatprep.subr.mxu0 0.0
      %678 = vmatpush2.msra.mxu0 0.0
      %679 = vmatprep.subr.mxu0 0.0
      %680 = vmatpush2.msra.mxu0 0.0
      %681 = vmatprep.subr.mxu0 0.0
      %682 = vmatpush2.msra.mxu0 0.0
      %683 = vmatprep.subr.mxu0 0.0
      %684 = vmatpush2.msra.mxu0 0.0
      %685 = vmatprep.subr.mxu0 0.0
      %686 = vmatpush2.msra.mxu0 0.0
      %687 = vmatprep.subr.mxu0 0.0
      %688 = vmatpush2.msra.mxu0 0.0
      %689 = vmatprep.subr.mxu0 0.0
      %690 = vmatpush2.msra.mxu0 0.0
      %691 = vmatprep.mubr.f32.mxu0 0.0
      %692 = vmatmul.mubr.f32.gmra.mxu0 %v625
      %v693 = vpop.f32.mrf.mxu0
      %v694 = vadd.f32 0.0, %v693
      %v695 = vpop.f32.mrf.mxu0
      %696 = vdwg.mxu0
      %697 = vrot.lane.b32.xlu0 %v203, 116
      %v698 = vpop.permute.xlu0 %697
      %699 = vrot.lane.b32.xlu0 %v201, 116
      %v700 = vpop.permute.xlu0 %699
      %v701 = vsel %vm204, %v698, 0
      %v703 = vsel %vm204, %v700, 0
      %705 = vmatprep.subr.mxu0 0.0
      %706 = vmatpush1.xpose.msra.mxu0 0.0
      %707 = vmatprep.subr.mxu0 0.0
      %708 = vmatpush1.xpose.msra.mxu0 0.0
      %709 = vmatprep.subr.mxu0 0.0
      %710 = vmatpush1.xpose.msra.mxu0 0.0
      %711 = vmatprep.subr.mxu0 0.0
      %712 = vmatpush1.xpose.msra.mxu0 0.0
      %713 = vmatprep.subr.mxu0 0.0
      %714 = vmatpush1.xpose.msra.mxu0 0.0
      %715 = vmatprep.subr.mxu0 0.0
      %716 = vmatpush1.xpose.msra.mxu0 0.0
      %717 = vmatprep.subr.mxu0 0.0
      %718 = vmatpush1.xpose.msra.mxu0 0.0
      %719 = vmatprep.subr.mxu0 0.0
      %720 = vmatpush1.xpose.msra.mxu0 0.0
      %721 = vmatprep.subr.mxu0 0.0
      %722 = vmatpush1.xpose.msra.mxu0 0.0
      %723 = vmatprep.subr.mxu0 0.0
      %724 = vmatpush1.xpose.msra.mxu0 0.0
      %725 = vmatprep.subr.mxu0 0.0
      %726 = vmatpush1.xpose.msra.mxu0 0.0
      %727 = vmatprep.subr.mxu0 0.0
      %728 = vmatpush1.xpose.msra.mxu0 0.0
      %729 = vmatprep.subr.mxu0 0.0
      %730 = vmatpush1.xpose.msra.mxu0 0.0
      %731 = vmatprep.subr.mxu0 0.0
      %732 = vmatpush1.xpose.msra.mxu0 0.0
      %733 = vmatprep.subr.mxu0 0.0
      %734 = vmatpush1.xpose.msra.mxu0 0.0
      %735 = vmatprep.subr.mxu0 0.0
      %736 = vmatpush1.xpose.msra.mxu0 %v703
      %737 = vmatprep.subr.mxu0 0.0
      %738 = vmatpush2.xpose.msra.mxu0 0.0
      %739 = vmatprep.subr.mxu0 0.0
      %740 = vmatpush2.xpose.msra.mxu0 0.0
      %741 = vmatprep.subr.mxu0 0.0
      %742 = vmatpush2.xpose.msra.mxu0 0.0
      %743 = vmatprep.subr.mxu0 0.0
      %744 = vmatpush2.xpose.msra.mxu0 0.0
      %745 = vmatprep.subr.mxu0 0.0
      %746 = vmatpush2.xpose.msra.mxu0 0.0
      %747 = vmatprep.subr.mxu0 0.0
      %748 = vmatpush2.xpose.msra.mxu0 0.0
      %749 = vmatprep.subr.mxu0 0.0
      %750 = vmatpush2.xpose.msra.mxu0 0.0
      %751 = vmatprep.subr.mxu0 0.0
      %752 = vmatpush2.xpose.msra.mxu0 0.0
      %753 = vmatprep.subr.mxu0 0.0
      %754 = vmatpush2.xpose.msra.mxu0 0.0
      %755 = vmatprep.subr.mxu0 0.0
      %756 = vmatpush2.xpose.msra.mxu0 0.0
      %757 = vmatprep.subr.mxu0 0.0
      %758 = vmatpush2.xpose.msra.mxu0 0.0
      %759 = vmatprep.subr.mxu0 0.0
      %760 = vmatpush2.xpose.msra.mxu0 0.0
      %761 = vmatprep.subr.mxu0 0.0
      %762 = vmatpush2.xpose.msra.mxu0 0.0
      %763 = vmatprep.subr.mxu0 0.0
      %764 = vmatpush2.xpose.msra.mxu0 0.0
      %765 = vmatprep.subr.mxu0 0.0
      %766 = vmatpush2.xpose.msra.mxu0 0.0
      %767 = vmatprep.subr.mxu0 0.0
      %768 = vmatpush2.xpose.msra.mxu0 0.0
      %769 = vmatprep.mubr.f32.mxu0 0.0
      %770 = vmatmul.mubr.f32.gmra.mxu0 %v701
      %v771 = vpop.f32.mrf.mxu0
      %v772 = vadd.f32 0.0, %v771
      %v773 = vpop.f32.mrf.mxu0
      %774 = vdwg.mxu0
      %v775 = vsel %vm281, %v772, -inf
      %776 = vmax.xlane.f32.xlu0 %v775
      %v777 = vpop.xlane.xlu0 %776
      %v778 = vsub.f32 %v772, %v777
      %v779 = vmul.f32 %v778, 1.442695
      %v780 = vpow.pop %v779
      %v781 = vsel %vm281, %v780, 0.0
      %782 = vadd.xlane.f32.xlu0 %v781
      %v783 = vpop.xlane.xlu0 %782
      %v784 = vrcp.pop %v783
      %v785 = vmul.f32 %v780, %v784
      %786 = vrot.lane.b32.xlu0 %v202, 116
      %v787 = vpop.permute.xlu0 %786
      %v790 = vsel %vm281, %v785, 0
      %792 = vmatprep.subr.mxu0 0.0
      %793 = vmatpush1.msra.mxu0 0.0
      %794 = vmatprep.subr.mxu0 0.0
      %795 = vmatpush1.msra.mxu0 0.0
      %796 = vmatprep.subr.mxu0 0.0
      %797 = vmatpush1.msra.mxu0 0.0
      %798 = vmatprep.subr.mxu0 0.0
      %799 = vmatpush1.msra.mxu0 0.0
      %800 = vmatprep.subr.mxu0 0.0
      %801 = vmatpush1.msra.mxu0 0.0
      %802 = vmatprep.subr.mxu0 0.0
      %803 = vmatpush1.msra.mxu0 0.0
      %804 = vmatprep.subr.mxu0 0.0
      %805 = vmatpush1.msra.mxu0 0.0
      %806 = vmatprep.subr.mxu0 0.0
      %807 = vmatpush1.msra.mxu0 0.0
      %808 = vmatprep.subr.mxu0 0.0
      %809 = vmatpush1.msra.mxu0 0.0
      %810 = vmatprep.subr.mxu0 0.0
      %811 = vmatpush1.msra.mxu0 0.0
      %812 = vmatprep.subr.mxu0 0.0
      %813 = vmatpush1.msra.mxu0 0.0
      %814 = vmatprep.subr.mxu0 0.0
      %815 = vmatpush1.msra.mxu0 0.0
      %816 = vmatprep.subr.mxu0 0.0
      %817 = vmatpush1.msra.mxu0 0.0
      %818 = vmatprep.subr.mxu0 0.0
      %819 = vmatpush1.msra.mxu0 0.0
      %820 = vmatprep.subr.mxu0 0.0
      %821 = vmatpush1.msra.mxu0 0.0
      %822 = vmatprep.subr.mxu0 0.0
      %823 = vmatpush1.msra.mxu0 %v787
      %824 = vmatprep.subr.mxu0 0.0
      %825 = vmatpush2.msra.mxu0 0.0
      %826 = vmatprep.subr.mxu0 0.0
      %827 = vmatpush2.msra.mxu0 0.0
      %828 = vmatprep.subr.mxu0 0.0
      %829 = vmatpush2.msra.mxu0 0.0
      %830 = vmatprep.subr.mxu0 0.0
      %831 = vmatpush2.msra.mxu0 0.0
      %832 = vmatprep.subr.mxu0 0.0
      %833 = vmatpush2.msra.mxu0 0.0
      %834 = vmatprep.subr.mxu0 0.0
      %835 = vmatpush2.msra.mxu0 0.0
      %836 = vmatprep.subr.mxu0 0.0
      %837 = vmatpush2.msra.mxu0 0.0
      %838 = vmatprep.subr.mxu0 0.0
      %839 = vmatpush2.msra.mxu0 0.0
      %840 = vmatprep.subr.mxu0 0.0
      %841 = vmatpush2.msra.mxu0 0.0
      %842 = vmatprep.subr.mxu0 0.0
      %843 = vmatpush2.msra.mxu0 0.0
      %844 = vmatprep.subr.mxu0 0.0
      %845 = vmatpush2.msra.mxu0 0.0
      %846 = vmatprep.subr.mxu0 0.0
      %847 = vmatpush2.msra.mxu0 0.0
      %848 = vmatprep.subr.mxu0 0.0
      %849 = vmatpush2.msra.mxu0 0.0
      %850 = vmatprep.subr.mxu0 0.0
      %851 = vmatpush2.msra.mxu0 0.0
      %852 = vmatprep.subr.mxu0 0.0
      %853 = vmatpush2.msra.mxu0 0.0
      %854 = vmatprep.subr.mxu0 0.0
      %855 = vmatpush2.msra.mxu0 0.0
      %856 = vmatprep.mubr.f32.mxu0 0.0
      %857 = vmatmul.mubr.f32.gmra.mxu0 %v790
      %v858 = vpop.f32.mrf.mxu0
      %v859 = vadd.f32 0.0, %v858
      %v860 = vpop.f32.mrf.mxu0
      %861 = vdwg.mxu0
      %862 = vrot.lane.b32.xlu0 %v203, 112
      %v863 = vpop.permute.xlu0 %862
      %864 = vrot.lane.b32.xlu0 %v201, 112
      %v865 = vpop.permute.xlu0 %864
      %v866 = vsel %vm204, %v863, 0
      %v868 = vsel %vm204, %v865, 0
      %870 = vmatprep.subr.mxu0 0.0
      %871 = vmatpush1.xpose.msra.mxu0 0.0
      %872 = vmatprep.subr.mxu0 0.0
      %873 = vmatpush1.xpose.msra.mxu0 0.0
      %874 = vmatprep.subr.mxu0 0.0
      %875 = vmatpush1.xpose.msra.mxu0 0.0
      %876 = vmatprep.subr.mxu0 0.0
      %877 = vmatpush1.xpose.msra.mxu0 0.0
      %878 = vmatprep.subr.mxu0 0.0
      %879 = vmatpush1.xpose.msra.mxu0 0.0
      %880 = vmatprep.subr.mxu0 0.0
      %881 = vmatpush1.xpose.msra.mxu0 0.0
      %882 = vmatprep.subr.mxu0 0.0
      %883 = vmatpush1.xpose.msra.mxu0 0.0
      %884 = vmatprep.subr.mxu0 0.0
      %885 = vmatpush1.xpose.msra.mxu0 0.0
      %886 = vmatprep.subr.mxu0 0.0
      %887 = vmatpush1.xpose.msra.mxu0 0.0
      %888 = vmatprep.subr.mxu0 0.0
      %889 = vmatpush1.xpose.msra.mxu0 0.0
      %890 = vmatprep.subr.mxu0 0.0
      %891 = vmatpush1.xpose.msra.mxu0 0.0
      %892 = vmatprep.subr.mxu0 0.0
      %893 = vmatpush1.xpose.msra.mxu0 0.0
      %894 = vmatprep.subr.mxu0 0.0
      %895 = vmatpush1.xpose.msra.mxu0 0.0
      %896 = vmatprep.subr.mxu0 0.0
      %897 = vmatpush1.xpose.msra.mxu0 0.0
      %898 = vmatprep.subr.mxu0 0.0
      %899 = vmatpush1.xpose.msra.mxu0 0.0
      %900 = vmatprep.subr.mxu0 0.0
      %901 = vmatpush1.xpose.msra.mxu0 %v868
      %902 = vmatprep.subr.mxu0 0.0
      %903 = vmatpush2.xpose.msra.mxu0 0.0
      %904 = vmatprep.subr.mxu0 0.0
      %905 = vmatpush2.xpose.msra.mxu0 0.0
      %906 = vmatprep.subr.mxu0 0.0
      %907 = vmatpush2.xpose.msra.mxu0 0.0
      %908 = vmatprep.subr.mxu0 0.0
      %909 = vmatpush2.xpose.msra.mxu0 0.0
      %910 = vmatprep.subr.mxu0 0.0
      %911 = vmatpush2.xpose.msra.mxu0 0.0
      %912 = vmatprep.subr.mxu0 0.0
      %913 = vmatpush2.xpose.msra.mxu0 0.0
      %914 = vmatprep.subr.mxu0 0.0
      %915 = vmatpush2.xpose.msra.mxu0 0.0
      %916 = vmatprep.subr.mxu0 0.0
      %917 = vmatpush2.xpose.msra.mxu0 0.0
      %918 = vmatprep.subr.mxu0 0.0
      %919 = vmatpush2.xpose.msra.mxu0 0.0
      %920 = vmatprep.subr.mxu0 0.0
      %921 = vmatpush2.xpose.msra.mxu0 0.0
      %922 = vmatprep.subr.mxu0 0.0
      %923 = vmatpush2.xpose.msra.mxu0 0.0
      %924 = vmatprep.subr.mxu0 0.0
      %925 = vmatpush2.xpose.msra.mxu0 0.0
      %926 = vmatprep.subr.mxu0 0.0
      %927 = vmatpush2.xpose.msra.mxu0 0.0
      %928 = vmatprep.subr.mxu0 0.0
      %929 = vmatpush2.xpose.msra.mxu0 0.0
      %930 = vmatprep.subr.mxu0 0.0
      %931 = vmatpush2.xpose.msra.mxu0 0.0
      %932 = vmatprep.subr.mxu0 0.0
      %933 = vmatpush2.xpose.msra.mxu0 0.0
      %934 = vmatprep.mubr.f32.mxu0 0.0
      %935 = vmatmul.mubr.f32.gmra.mxu0 %v866
      %v936 = vpop.f32.mrf.mxu0
      %v937 = vadd.f32 0.0, %v936
      %v938 = vpop.f32.mrf.mxu0
      %939 = vdwg.mxu0
      %v940 = vsel %vm281, %v937, -inf
      %941 = vmax.xlane.f32.xlu0 %v940
      %v942 = vpop.xlane.xlu0 %941
      %v943 = vsub.f32 %v937, %v942
      %v944 = vmul.f32 %v943, 1.442695
      %v945 = vpow.pop %v944
      %v946 = vsel %vm281, %v945, 0.0
      %947 = vadd.xlane.f32.xlu0 %v946
      %v948 = vpop.xlane.xlu0 %947
      %v949 = vrcp.pop %v948
      %v950 = vmul.f32 %v945, %v949
      %951 = vrot.lane.b32.xlu0 %v202, 112
      %v952 = vpop.permute.xlu0 %951
      %v955 = vsel %vm281, %v950, 0
      %957 = vmatprep.subr.mxu0 0.0
      %958 = vmatpush1.msra.mxu0 0.0
      %959 = vmatprep.subr.mxu0 0.0
      %960 = vmatpush1.msra.mxu0 0.0
      %961 = vmatprep.subr.mxu0 0.0
      %962 = vmatpush1.msra.mxu0 0.0
      %963 = vmatprep.subr.mxu0 0.0
      %964 = vmatpush1.msra.mxu0 0.0
      %965 = vmatprep.subr.mxu0 0.0
      %966 = vmatpush1.msra.mxu0 0.0
      %967 = vmatprep.subr.mxu0 0.0
      %968 = vmatpush1.msra.mxu0 0.0
      %969 = vmatprep.subr.mxu0 0.0
      %970 = vmatpush1.msra.mxu0 0.0
      %971 = vmatprep.subr.mxu0 0.0
      %972 = vmatpush1.msra.mxu0 0.0
      %973 = vmatprep.subr.mxu0 0.0
      %974 = vmatpush1.msra.mxu0 0.0
      %975 = vmatprep.subr.mxu0 0.0
      %976 = vmatpush1.msra.mxu0 0.0
      %977 = vmatprep.subr.mxu0 0.0
      %978 = vmatpush1.msra.mxu0 0.0
      %979 = vmatprep.subr.mxu0 0.0
      %980 = vmatpush1.msra.mxu0 0.0
      %981 = vmatprep.subr.mxu0 0.0
      %982 = vmatpush1.msra.mxu0 0.0
      %983 = vmatprep.subr.mxu0 0.0
      %984 = vmatpush1.msra.mxu0 0.0
      %985 = vmatprep.subr.mxu0 0.0
      %986 = vmatpush1.msra.mxu0 0.0
      %987 = vmatprep.subr.mxu0 0.0
      %988 = vmatpush1.msra.mxu0 %v952
      %989 = vmatprep.subr.mxu0 0.0
      %990 = vmatpush2.msra.mxu0 0.0
      %991 = vmatprep.subr.mxu0 0.0
      %992 = vmatpush2.msra.mxu0 0.0
      %993 = vmatprep.subr.mxu0 0.0
      %994 = vmatpush2.msra.mxu0 0.0
      %995 = vmatprep.subr.mxu0 0.0
      %996 = vmatpush2.msra.mxu0 0.0
      %997 = vmatprep.subr.mxu0 0.0
      %998 = vmatpush2.msra.mxu0 0.0
      %999 = vmatprep.subr.mxu0 0.0
      %1000 = vmatpush2.msra.mxu0 0.0
      %1001 = vmatprep.subr.mxu0 0.0
      %1002 = vmatpush2.msra.mxu0 0.0
      %1003 = vmatprep.subr.mxu0 0.0
      %1004 = vmatpush2.msra.mxu0 0.0
      %1005 = vmatprep.subr.mxu0 0.0
      %1006 = vmatpush2.msra.mxu0 0.0
      %1007 = vmatprep.subr.mxu0 0.0
      %1008 = vmatpush2.msra.mxu0 0.0
      %1009 = vmatprep.subr.mxu0 0.0
      %1010 = vmatpush2.msra.mxu0 0.0
      %1011 = vmatprep.subr.mxu0 0.0
      %1012 = vmatpush2.msra.mxu0 0.0
      %1013 = vmatprep.subr.mxu0 0.0
      %1014 = vmatpush2.msra.mxu0 0.0
      %1015 = vmatprep.subr.mxu0 0.0
      %1016 = vmatpush2.msra.mxu0 0.0
      %1017 = vmatprep.subr.mxu0 0.0
      %1018 = vmatpush2.msra.mxu0 0.0
      %1019 = vmatprep.subr.mxu0 0.0
      %1020 = vmatpush2.msra.mxu0 0.0
      %1021 = vmatprep.mubr.f32.mxu0 0.0
      %1022 = vmatmul.mubr.f32.gmra.mxu0 %v955
      %v1023 = vpop.f32.mrf.mxu0
      %v1024 = vadd.f32 0.0, %v1023
      %v1025 = vpop.f32.mrf.mxu0
      %1026 = vdwg.mxu0
      %1027 = vrot.lane.b32.xlu0 %v203, 108
      %v1028 = vpop.permute.xlu0 %1027
      %1029 = vrot.lane.b32.xlu0 %v201, 108
      %v1030 = vpop.permute.xlu0 %1029
      %v1031 = vsel %vm204, %v1028, 0
      %v1033 = vsel %vm204, %v1030, 0
      %1035 = vmatprep.subr.mxu0 0.0
      %1036 = vmatpush1.xpose.msra.mxu0 0.0
      %1037 = vmatprep.subr.mxu0 0.0
      %1038 = vmatpush1.xpose.msra.mxu0 0.0
      %1039 = vmatprep.subr.mxu0 0.0
      %1040 = vmatpush1.xpose.msra.mxu0 0.0
      %1041 = vmatprep.subr.mxu0 0.0
      %1042 = vmatpush1.xpose.msra.mxu0 0.0
      %1043 = vmatprep.subr.mxu0 0.0
      %1044 = vmatpush1.xpose.msra.mxu0 0.0
      %1045 = vmatprep.subr.mxu0 0.0
      %1046 = vmatpush1.xpose.msra.mxu0 0.0
      %1047 = vmatprep.subr.mxu0 0.0
      %1048 = vmatpush1.xpose.msra.mxu0 0.0
      %1049 = vmatprep.subr.mxu0 0.0
      %1050 = vmatpush1.xpose.msra.mxu0 0.0
      %1051 = vmatprep.subr.mxu0 0.0
      %1052 = vmatpush1.xpose.msra.mxu0 0.0
      %1053 = vmatprep.subr.mxu0 0.0
      %1054 = vmatpush1.xpose.msra.mxu0 0.0
      %1055 = vmatprep.subr.mxu0 0.0
      %1056 = vmatpush1.xpose.msra.mxu0 0.0
      %1057 = vmatprep.subr.mxu0 0.0
      %1058 = vmatpush1.xpose.msra.mxu0 0.0
      %1059 = vmatprep.subr.mxu0 0.0
      %1060 = vmatpush1.xpose.msra.mxu0 0.0
      %1061 = vmatprep.subr.mxu0 0.0
      %1062 = vmatpush1.xpose.msra.mxu0 0.0
      %1063 = vmatprep.subr.mxu0 0.0
      %1064 = vmatpush1.xpose.msra.mxu0 0.0
      %1065 = vmatprep.subr.mxu0 0.0
      %1066 = vmatpush1.xpose.msra.mxu0 %v1033
      %1067 = vmatprep.subr.mxu0 0.0
      %1068 = vmatpush2.xpose.msra.mxu0 0.0
      %1069 = vmatprep.subr.mxu0 0.0
      %1070 = vmatpush2.xpose.msra.mxu0 0.0
      %1071 = vmatprep.subr.mxu0 0.0
      %1072 = vmatpush2.xpose.msra.mxu0 0.0
      %1073 = vmatprep.subr.mxu0 0.0
      %1074 = vmatpush2.xpose.msra.mxu0 0.0
      %1075 = vmatprep.subr.mxu0 0.0
      %1076 = vmatpush2.xpose.msra.mxu0 0.0
      %1077 = vmatprep.subr.mxu0 0.0
      %1078 = vmatpush2.xpose.msra.mxu0 0.0
      %1079 = vmatprep.subr.mxu0 0.0
      %1080 = vmatpush2.xpose.msra.mxu0 0.0
      %1081 = vmatprep.subr.mxu0 0.0
      %1082 = vmatpush2.xpose.msra.mxu0 0.0
      %1083 = vmatprep.subr.mxu0 0.0
      %1084 = vmatpush2.xpose.msra.mxu0 0.0
      %1085 = vmatprep.subr.mxu0 0.0
      %1086 = vmatpush2.xpose.msra.mxu0 0.0
      %1087 = vmatprep.subr.mxu0 0.0
      %1088 = vmatpush2.xpose.msra.mxu0 0.0
      %1089 = vmatprep.subr.mxu0 0.0
      %1090 = vmatpush2.xpose.msra.mxu0 0.0
      %1091 = vmatprep.subr.mxu0 0.0
      %1092 = vmatpush2.xpose.msra.mxu0 0.0
      %1093 = vmatprep.subr.mxu0 0.0
      %1094 = vmatpush2.xpose.msra.mxu0 0.0
      %1095 = vmatprep.subr.mxu0 0.0
      %1096 = vmatpush2.xpose.msra.mxu0 0.0
      %1097 = vmatprep.subr.mxu0 0.0
      %1098 = vmatpush2.xpose.msra.mxu0 0.0
      %1099 = vmatprep.mubr.f32.mxu0 0.0
      %1100 = vmatmul.mubr.f32.gmra.mxu0 %v1031
      %v1101 = vpop.f32.mrf.mxu0
      %v1102 = vadd.f32 0.0, %v1101
      %v1103 = vpop.f32.mrf.mxu0
      %1104 = vdwg.mxu0
      %v1105 = vsel %vm281, %v1102, -inf
      %1106 = vmax.xlane.f32.xlu0 %v1105
      %v1107 = vpop.xlane.xlu0 %1106
      %v1108 = vsub.f32 %v1102, %v1107
      %v1109 = vmul.f32 %v1108, 1.442695
      %v1110 = vpow.pop %v1109
      %v1111 = vsel %vm281, %v1110, 0.0
      %1112 = vadd.xlane.f32.xlu0 %v1111
      %v1113 = vpop.xlane.xlu0 %1112
      %v1114 = vrcp.pop %v1113
      %v1115 = vmul.f32 %v1110, %v1114
      %1116 = vrot.lane.b32.xlu0 %v202, 108
      %v1117 = vpop.permute.xlu0 %1116
      %v1120 = vsel %vm281, %v1115, 0
      %1122 = vmatprep.subr.mxu0 0.0
      %1123 = vmatpush1.msra.mxu0 0.0
      %1124 = vmatprep.subr.mxu0 0.0
      %1125 = vmatpush1.msra.mxu0 0.0
      %1126 = vmatprep.subr.mxu0 0.0
      %1127 = vmatpush1.msra.mxu0 0.0
      %1128 = vmatprep.subr.mxu0 0.0
      %1129 = vmatpush1.msra.mxu0 0.0
      %1130 = vmatprep.subr.mxu0 0.0
      %1131 = vmatpush1.msra.mxu0 0.0
      %1132 = vmatprep.subr.mxu0 0.0
      %1133 = vmatpush1.msra.mxu0 0.0
      %1134 = vmatprep.subr.mxu0 0.0
      %1135 = vmatpush1.msra.mxu0 0.0
      %1136 = vmatprep.subr.mxu0 0.0
      %1137 = vmatpush1.msra.mxu0 0.0
      %1138 = vmatprep.subr.mxu0 0.0
      %1139 = vmatpush1.msra.mxu0 0.0
      %1140 = vmatprep.subr.mxu0 0.0
      %1141 = vmatpush1.msra.mxu0 0.0
      %1142 = vmatprep.subr.mxu0 0.0
      %1143 = vmatpush1.msra.mxu0 0.0
      %1144 = vmatprep.subr.mxu0 0.0
      %1145 = vmatpush1.msra.mxu0 0.0
      %1146 = vmatprep.subr.mxu0 0.0
      %1147 = vmatpush1.msra.mxu0 0.0
      %1148 = vmatprep.subr.mxu0 0.0
      %1149 = vmatpush1.msra.mxu0 0.0
      %1150 = vmatprep.subr.mxu0 0.0
      %1151 = vmatpush1.msra.mxu0 0.0
      %1152 = vmatprep.subr.mxu0 0.0
      %1153 = vmatpush1.msra.mxu0 %v1117
      %1154 = vmatprep.subr.mxu0 0.0
      %1155 = vmatpush2.msra.mxu0 0.0
      %1156 = vmatprep.subr.mxu0 0.0
      %1157 = vmatpush2.msra.mxu0 0.0
      %1158 = vmatprep.subr.mxu0 0.0
      %1159 = vmatpush2.msra.mxu0 0.0
      %1160 = vmatprep.subr.mxu0 0.0
      %1161 = vmatpush2.msra.mxu0 0.0
      %1162 = vmatprep.subr.mxu0 0.0
      %1163 = vmatpush2.msra.mxu0 0.0
      %1164 = vmatprep.subr.mxu0 0.0
      %1165 = vmatpush2.msra.mxu0 0.0
      %1166 = vmatprep.subr.mxu0 0.0
      %1167 = vmatpush2.msra.mxu0 0.0
      %1168 = vmatprep.subr.mxu0 0.0
      %1169 = vmatpush2.msra.mxu0 0.0
      %1170 = vmatprep.subr.mxu0 0.0
      %1171 = vmatpush2.msra.mxu0 0.0
      %1172 = vmatprep.subr.mxu0 0.0
      %1173 = vmatpush2.msra.mxu0 0.0
      %1174 = vmatprep.subr.mxu0 0.0
      %1175 = vmatpush2.msra.mxu0 0.0
      %1176 = vmatprep.subr.mxu0 0.0
      %1177 = vmatpush2.msra.mxu0 0.0
      %1178 = vmatprep.subr.mxu0 0.0
      %1179 = vmatpush2.msra.mxu0 0.0
      %1180 = vmatprep.subr.mxu0 0.0
      %1181 = vmatpush2.msra.mxu0 0.0
      %1182 = vmatprep.subr.mxu0 0.0
      %1183 = vmatpush2.msra.mxu0 0.0
      %1184 = vmatprep.subr.mxu0 0.0
      %1185 = vmatpush2.msra.mxu0 0.0
      %1186 = vmatprep.mubr.f32.mxu0 0.0
      %1187 = vmatmul.mubr.f32.gmra.mxu0 %v1120
      %v1188 = vpop.f32.mrf.mxu0
      %v1189 = vadd.f32 0.0, %v1188
      %v1190 = vpop.f32.mrf.mxu0
      %1191 = vdwg.mxu0
      %1192 = vrot.lane.b32.xlu0 %v203, 104
      %v1193 = vpop.permute.xlu0 %1192
      %1194 = vrot.lane.b32.xlu0 %v201, 104
      %v1195 = vpop.permute.xlu0 %1194
      %v1196 = vsel %vm204, %v1193, 0
      %v1198 = vsel %vm204, %v1195, 0
      %1200 = vmatprep.subr.mxu0 0.0
      %1201 = vmatpush1.xpose.msra.mxu0 0.0
      %1202 = vmatprep.subr.mxu0 0.0
      %1203 = vmatpush1.xpose.msra.mxu0 0.0
      %1204 = vmatprep.subr.mxu0 0.0
      %1205 = vmatpush1.xpose.msra.mxu0 0.0
      %1206 = vmatprep.subr.mxu0 0.0
      %1207 = vmatpush1.xpose.msra.mxu0 0.0
      %1208 = vmatprep.subr.mxu0 0.0
      %1209 = vmatpush1.xpose.msra.mxu0 0.0
      %1210 = vmatprep.subr.mxu0 0.0
      %1211 = vmatpush1.xpose.msra.mxu0 0.0
      %1212 = vmatprep.subr.mxu0 0.0
      %1213 = vmatpush1.xpose.msra.mxu0 0.0
      %1214 = vmatprep.subr.mxu0 0.0
      %1215 = vmatpush1.xpose.msra.mxu0 0.0
      %1216 = vmatprep.subr.mxu0 0.0
      %1217 = vmatpush1.xpose.msra.mxu0 0.0
      %1218 = vmatprep.subr.mxu0 0.0
      %1219 = vmatpush1.xpose.msra.mxu0 0.0
      %1220 = vmatprep.subr.mxu0 0.0
      %1221 = vmatpush1.xpose.msra.mxu0 0.0
      %1222 = vmatprep.subr.mxu0 0.0
      %1223 = vmatpush1.xpose.msra.mxu0 0.0
      %1224 = vmatprep.subr.mxu0 0.0
      %1225 = vmatpush1.xpose.msra.mxu0 0.0
      %1226 = vmatprep.subr.mxu0 0.0
      %1227 = vmatpush1.xpose.msra.mxu0 0.0
      %1228 = vmatprep.subr.mxu0 0.0
      %1229 = vmatpush1.xpose.msra.mxu0 0.0
      %1230 = vmatprep.subr.mxu0 0.0
      %1231 = vmatpush1.xpose.msra.mxu0 %v1198
      %1232 = vmatprep.subr.mxu0 0.0
      %1233 = vmatpush2.xpose.msra.mxu0 0.0
      %1234 = vmatprep.subr.mxu0 0.0
      %1235 = vmatpush2.xpose.msra.mxu0 0.0
      %1236 = vmatprep.subr.mxu0 0.0
      %1237 = vmatpush2.xpose.msra.mxu0 0.0
      %1238 = vmatprep.subr.mxu0 0.0
      %1239 = vmatpush2.xpose.msra.mxu0 0.0
      %1240 = vmatprep.subr.mxu0 0.0
      %1241 = vmatpush2.xpose.msra.mxu0 0.0
      %1242 = vmatprep.subr.mxu0 0.0
      %1243 = vmatpush2.xpose.msra.mxu0 0.0
      %1244 = vmatprep.subr.mxu0 0.0
      %1245 = vmatpush2.xpose.msra.mxu0 0.0
      %1246 = vmatprep.subr.mxu0 0.0
      %1247 = vmatpush2.xpose.msra.mxu0 0.0
      %1248 = vmatprep.subr.mxu0 0.0
      %1249 = vmatpush2.xpose.msra.mxu0 0.0
      %1250 = vmatprep.subr.mxu0 0.0
      %1251 = vmatpush2.xpose.msra.mxu0 0.0
      %1252 = vmatprep.subr.mxu0 0.0
      %1253 = vmatpush2.xpose.msra.mxu0 0.0
      %1254 = vmatprep.subr.mxu0 0.0
      %1255 = vmatpush2.xpose.msra.mxu0 0.0
      %1256 = vmatprep.subr.mxu0 0.0
      %1257 = vmatpush2.xpose.msra.mxu0 0.0
      %1258 = vmatprep.subr.mxu0 0.0
      %1259 = vmatpush2.xpose.msra.mxu0 0.0
      %1260 = vmatprep.subr.mxu0 0.0
      %1261 = vmatpush2.xpose.msra.mxu0 0.0
      %1262 = vmatprep.subr.mxu0 0.0
      %1263 = vmatpush2.xpose.msra.mxu0 0.0
      %1264 = vmatprep.mubr.f32.mxu0 0.0
      %1265 = vmatmul.mubr.f32.gmra.mxu0 %v1196
      %v1266 = vpop.f32.mrf.mxu0
      %v1267 = vadd.f32 0.0, %v1266
      %v1268 = vpop.f32.mrf.mxu0
      %1269 = vdwg.mxu0
      %v1270 = vsel %vm281, %v1267, -inf
      %1271 = vmax.xlane.f32.xlu0 %v1270
      %v1272 = vpop.xlane.xlu0 %1271
      %v1273 = vsub.f32 %v1267, %v1272
      %v1274 = vmul.f32 %v1273, 1.442695
      %v1275 = vpow.pop %v1274
      %v1276 = vsel %vm281, %v1275, 0.0
      %1277 = vadd.xlane.f32.xlu0 %v1276
      %v1278 = vpop.xlane.xlu0 %1277
      %v1279 = vrcp.pop %v1278
      %v1280 = vmul.f32 %v1275, %v1279
      %1281 = vrot.lane.b32.xlu0 %v202, 104
      %v1282 = vpop.permute.xlu0 %1281
      %v1285 = vsel %vm281, %v1280, 0
      %1287 = vmatprep.subr.mxu0 0.0
      %1288 = vmatpush1.msra.mxu0 0.0
      %1289 = vmatprep.subr.mxu0 0.0
      %1290 = vmatpush1.msra.mxu0 0.0
      %1291 = vmatprep.subr.mxu0 0.0
      %1292 = vmatpush1.msra.mxu0 0.0
      %1293 = vmatprep.subr.mxu0 0.0
      %1294 = vmatpush1.msra.mxu0 0.0
      %1295 = vmatprep.subr.mxu0 0.0
      %1296 = vmatpush1.msra.mxu0 0.0
      %1297 = vmatprep.subr.mxu0 0.0
      %1298 = vmatpush1.msra.mxu0 0.0
      %1299 = vmatprep.subr.mxu0 0.0
      %1300 = vmatpush1.msra.mxu0 0.0
      %1301 = vmatprep.subr.mxu0 0.0
      %1302 = vmatpush1.msra.mxu0 0.0
      %1303 = vmatprep.subr.mxu0 0.0
      %1304 = vmatpush1.msra.mxu0 0.0
      %1305 = vmatprep.subr.mxu0 0.0
      %1306 = vmatpush1.msra.mxu0 0.0
      %1307 = vmatprep.subr.mxu0 0.0
      %1308 = vmatpush1.msra.mxu0 0.0
      %1309 = vmatprep.subr.mxu0 0.0
      %1310 = vmatpush1.msra.mxu0 0.0
      %1311 = vmatprep.subr.mxu0 0.0
      %1312 = vmatpush1.msra.mxu0 0.0
      %1313 = vmatprep.subr.mxu0 0.0
      %1314 = vmatpush1.msra.mxu0 0.0
      %1315 = vmatprep.subr.mxu0 0.0
      %1316 = vmatpush1.msra.mxu0 0.0
      %1317 = vmatprep.subr.mxu0 0.0
      %1318 = vmatpush1.msra.mxu0 %v1282
      %1319 = vmatprep.subr.mxu0 0.0
      %1320 = vmatpush2.msra.mxu0 0.0
      %1321 = vmatprep.subr.mxu0 0.0
      %1322 = vmatpush2.msra.mxu0 0.0
      %1323 = vmatprep.subr.mxu0 0.0
      %1324 = vmatpush2.msra.mxu0 0.0
      %1325 = vmatprep.subr.mxu0 0.0
      %1326 = vmatpush2.msra.mxu0 0.0
      %1327 = vmatprep.subr.mxu0 0.0
      %1328 = vmatpush2.msra.mxu0 0.0
      %1329 = vmatprep.subr.mxu0 0.0
      %1330 = vmatpush2.msra.mxu0 0.0
      %1331 = vmatprep.subr.mxu0 0.0
      %1332 = vmatpush2.msra.mxu0 0.0
      %1333 = vmatprep.subr.mxu0 0.0
      %1334 = vmatpush2.msra.mxu0 0.0
      %1335 = vmatprep.subr.mxu0 0.0
      %1336 = vmatpush2.msra.mxu0 0.0
      %1337 = vmatprep.subr.mxu0 0.0
      %1338 = vmatpush2.msra.mxu0 0.0
      %1339 = vmatprep.subr.mxu0 0.0
      %1340 = vmatpush2.msra.mxu0 0.0
      %1341 = vmatprep.subr.mxu0 0.0
      %1342 = vmatpush2.msra.mxu0 0.0
      %1343 = vmatprep.subr.mxu0 0.0
      %1344 = vmatpush2.msra.mxu0 0.0
      %1345 = vmatprep.subr.mxu0 0.0
      %1346 = vmatpush2.msra.mxu0 0.0
      %1347 = vmatprep.subr.mxu0 0.0
      %1348 = vmatpush2.msra.mxu0 0.0
      %1349 = vmatprep.subr.mxu0 0.0
      %1350 = vmatpush2.msra.mxu0 0.0
      %1351 = vmatprep.mubr.f32.mxu0 0.0
      %1352 = vmatmul.mubr.f32.gmra.mxu0 %v1285
      %v1353 = vpop.f32.mrf.mxu0
      %v1354 = vadd.f32 0.0, %v1353
      %v1355 = vpop.f32.mrf.mxu0
      %1356 = vdwg.mxu0
      %1357 = vrot.lane.b32.xlu0 %v203, 100
      %v1358 = vpop.permute.xlu0 %1357
      %1359 = vrot.lane.b32.xlu0 %v201, 100
      %v1360 = vpop.permute.xlu0 %1359
      %v1361 = vsel %vm204, %v1358, 0
      %v1363 = vsel %vm204, %v1360, 0
      %1365 = vmatprep.subr.mxu0 0.0
      %1366 = vmatpush1.xpose.msra.mxu0 0.0
      %1367 = vmatprep.subr.mxu0 0.0
      %1368 = vmatpush1.xpose.msra.mxu0 0.0
      %1369 = vmatprep.subr.mxu0 0.0
      %1370 = vmatpush1.xpose.msra.mxu0 0.0
      %1371 = vmatprep.subr.mxu0 0.0
      %1372 = vmatpush1.xpose.msra.mxu0 0.0
      %1373 = vmatprep.subr.mxu0 0.0
      %1374 = vmatpush1.xpose.msra.mxu0 0.0
      %1375 = vmatprep.subr.mxu0 0.0
      %1376 = vmatpush1.xpose.msra.mxu0 0.0
      %1377 = vmatprep.subr.mxu0 0.0
      %1378 = vmatpush1.xpose.msra.mxu0 0.0
      %1379 = vmatprep.subr.mxu0 0.0
      %1380 = vmatpush1.xpose.msra.mxu0 0.0
      %1381 = vmatprep.subr.mxu0 0.0
      %1382 = vmatpush1.xpose.msra.mxu0 0.0
      %1383 = vmatprep.subr.mxu0 0.0
      %1384 = vmatpush1.xpose.msra.mxu0 0.0
      %1385 = vmatprep.subr.mxu0 0.0
      %1386 = vmatpush1.xpose.msra.mxu0 0.0
      %1387 = vmatprep.subr.mxu0 0.0
      %1388 = vmatpush1.xpose.msra.mxu0 0.0
      %1389 = vmatprep.subr.mxu0 0.0
      %1390 = vmatpush1.xpose.msra.mxu0 0.0
      %1391 = vmatprep.subr.mxu0 0.0
      %1392 = vmatpush1.xpose.msra.mxu0 0.0
      %1393 = vmatprep.subr.mxu0 0.0
      %1394 = vmatpush1.xpose.msra.mxu0 0.0
      %1395 = vmatprep.subr.mxu0 0.0
      %1396 = vmatpush1.xpose.msra.mxu0 %v1363
      %1397 = vmatprep.subr.mxu0 0.0
      %1398 = vmatpush2.xpose.msra.mxu0 0.0
      %1399 = vmatprep.subr.mxu0 0.0
      %1400 = vmatpush2.xpose.msra.mxu0 0.0
      %1401 = vmatprep.subr.mxu0 0.0
      %1402 = vmatpush2.xpose.msra.mxu0 0.0
      %1403 = vmatprep.subr.mxu0 0.0
      %1404 = vmatpush2.xpose.msra.mxu0 0.0
      %1405 = vmatprep.subr.mxu0 0.0
      %1406 = vmatpush2.xpose.msra.mxu0 0.0
      %1407 = vmatprep.subr.mxu0 0.0
      %1408 = vmatpush2.xpose.msra.mxu0 0.0
      %1409 = vmatprep.subr.mxu0 0.0
      %1410 = vmatpush2.xpose.msra.mxu0 0.0
      %1411 = vmatprep.subr.mxu0 0.0
      %1412 = vmatpush2.xpose.msra.mxu0 0.0
      %1413 = vmatprep.subr.mxu0 0.0
      %1414 = vmatpush2.xpose.msra.mxu0 0.0
      %1415 = vmatprep.subr.mxu0 0.0
      %1416 = vmatpush2.xpose.msra.mxu0 0.0
      %1417 = vmatprep.subr.mxu0 0.0
      %1418 = vmatpush2.xpose.msra.mxu0 0.0
      %1419 = vmatprep.subr.mxu0 0.0
      %1420 = vmatpush2.xpose.msra.mxu0 0.0
      %1421 = vmatprep.subr.mxu0 0.0
      %1422 = vmatpush2.xpose.msra.mxu0 0.0
      %1423 = vmatprep.subr.mxu0 0.0
      %1424 = vmatpush2.xpose.msra.mxu0 0.0
      %1425 = vmatprep.subr.mxu0 0.0
      %1426 = vmatpush2.xpose.msra.mxu0 0.0
      %1427 = vmatprep.subr.mxu0 0.0
      %1428 = vmatpush2.xpose.msra.mxu0 0.0
      %1429 = vmatprep.mubr.f32.mxu0 0.0
      %1430 = vmatmul.mubr.f32.gmra.mxu0 %v1361
      %v1431 = vpop.f32.mrf.mxu0
      %v1432 = vadd.f32 0.0, %v1431
      %v1433 = vpop.f32.mrf.mxu0
      %1434 = vdwg.mxu0
      %v1435 = vsel %vm281, %v1432, -inf
      %1436 = vmax.xlane.f32.xlu0 %v1435
      %v1437 = vpop.xlane.xlu0 %1436
      %v1438 = vsub.f32 %v1432, %v1437
      %v1439 = vmul.f32 %v1438, 1.442695
      %v1440 = vpow.pop %v1439
      %v1441 = vsel %vm281, %v1440, 0.0
      %1442 = vadd.xlane.f32.xlu0 %v1441
      %v1443 = vpop.xlane.xlu0 %1442
      %v1444 = vrcp.pop %v1443
      %v1445 = vmul.f32 %v1440, %v1444
      %1446 = vrot.lane.b32.xlu0 %v202, 100
      %v1447 = vpop.permute.xlu0 %1446
      %v1450 = vsel %vm281, %v1445, 0
      %1452 = vmatprep.subr.mxu0 0.0
      %1453 = vmatpush1.msra.mxu0 0.0
      %1454 = vmatprep.subr.mxu0 0.0
      %1455 = vmatpush1.msra.mxu0 0.0
      %1456 = vmatprep.subr.mxu0 0.0
      %1457 = vmatpush1.msra.mxu0 0.0
      %1458 = vmatprep.subr.mxu0 0.0
      %1459 = vmatpush1.msra.mxu0 0.0
      %1460 = vmatprep.subr.mxu0 0.0
      %1461 = vmatpush1.msra.mxu0 0.0
      %1462 = vmatprep.subr.mxu0 0.0
      %1463 = vmatpush1.msra.mxu0 0.0
      %1464 = vmatprep.subr.mxu0 0.0
      %1465 = vmatpush1.msra.mxu0 0.0
      %1466 = vmatprep.subr.mxu0 0.0
      %1467 = vmatpush1.msra.mxu0 0.0
      %1468 = vmatprep.subr.mxu0 0.0
      %1469 = vmatpush1.msra.mxu0 0.0
      %1470 = vmatprep.subr.mxu0 0.0
      %1471 = vmatpush1.msra.mxu0 0.0
      %1472 = vmatprep.subr.mxu0 0.0
      %1473 = vmatpush1.msra.mxu0 0.0
      %1474 = vmatprep.subr.mxu0 0.0
      %1475 = vmatpush1.msra.mxu0 0.0
      %1476 = vmatprep.subr.mxu0 0.0
      %1477 = vmatpush1.msra.mxu0 0.0
      %1478 = vmatprep.subr.mxu0 0.0
      %1479 = vmatpush1.msra.mxu0 0.0
      %1480 = vmatprep.subr.mxu0 0.0
      %1481 = vmatpush1.msra.mxu0 0.0
      %1482 = vmatprep.subr.mxu0 0.0
      %1483 = vmatpush1.msra.mxu0 %v1447
      %1484 = vmatprep.subr.mxu0 0.0
      %1485 = vmatpush2.msra.mxu0 0.0
      %1486 = vmatprep.subr.mxu0 0.0
      %1487 = vmatpush2.msra.mxu0 0.0
      %1488 = vmatprep.subr.mxu0 0.0
      %1489 = vmatpush2.msra.mxu0 0.0
      %1490 = vmatprep.subr.mxu0 0.0
      %1491 = vmatpush2.msra.mxu0 0.0
      %1492 = vmatprep.subr.mxu0 0.0
      %1493 = vmatpush2.msra.mxu0 0.0
      %1494 = vmatprep.subr.mxu0 0.0
      %1495 = vmatpush2.msra.mxu0 0.0
      %1496 = vmatprep.subr.mxu0 0.0
      %1497 = vmatpush2.msra.mxu0 0.0
      %1498 = vmatprep.subr.mxu0 0.0
      %1499 = vmatpush2.msra.mxu0 0.0
      %1500 = vmatprep.subr.mxu0 0.0
      %1501 = vmatpush2.msra.mxu0 0.0
      %1502 = vmatprep.subr.mxu0 0.0
      %1503 = vmatpush2.msra.mxu0 0.0
      %1504 = vmatprep.subr.mxu0 0.0
      %1505 = vmatpush2.msra.mxu0 0.0
      %1506 = vmatprep.subr.mxu0 0.0
      %1507 = vmatpush2.msra.mxu0 0.0
      %1508 = vmatprep.subr.mxu0 0.0
      %1509 = vmatpush2.msra.mxu0 0.0
      %1510 = vmatprep.subr.mxu0 0.0
      %1511 = vmatpush2.msra.mxu0 0.0
      %1512 = vmatprep.subr.mxu0 0.0
      %1513 = vmatpush2.msra.mxu0 0.0
      %1514 = vmatprep.subr.mxu0 0.0
      %1515 = vmatpush2.msra.mxu0 0.0
      %1516 = vmatprep.mubr.f32.mxu0 0.0
      %1517 = vmatmul.mubr.f32.gmra.mxu0 %v1450
      %v1518 = vpop.f32.mrf.mxu0
      %v1519 = vadd.f32 0.0, %v1518
      %v1520 = vpop.f32.mrf.mxu0
      %1521 = vdwg.mxu0
      %1523 = vrot.lane.b32.xlu0 %v529, 4
      %v1524 = vpop.permute.xlu0 %1523
      %1527 = vrot.lane.b32.xlu0 %v694, 8
      %v1528 = vpop.permute.xlu0 %1527
      %1531 = vrot.lane.b32.xlu0 %v859, 12
      %v1532 = vpop.permute.xlu0 %1531
      %1535 = vrot.lane.b32.xlu0 %v1024, 16
      %v1536 = vpop.permute.xlu0 %1535
      %1539 = vrot.lane.b32.xlu0 %v1189, 20
      %v1540 = vpop.permute.xlu0 %1539
      %1543 = vrot.lane.b32.xlu0 %v1354, 24
      %v1544 = vpop.permute.xlu0 %1543
      %1547 = vrot.lane.b32.xlu0 %v1519, 28
      %v1548 = vpop.permute.xlu0 %1547
      %v1550 = vsel %vm204, %v363, %v1524
      %v1551 = vsel %vm281, %v1550, %v1528
      %vm1552 = vcmask 97280
      %v1553 = vsel %vm1552, %v1551, %v1532
      %vm1554 = vcmask 130048
      %v1555 = vsel %vm1554, %v1553, %v1536
      %vm1556 = vcmask 162816
      %v1557 = vsel %vm1556, %v1555, %v1540
      %vm1558 = vcmask 195584
      %v1559 = vsel %vm1558, %v1557, %v1544
      %vm1560 = vcmask 228352
      %v1561 = vsel %vm1560, %v1559, %v1548
      %vm1562 = vcmask 261120
      %1563 = vst.msk [vmem:[%s199] sm:$0xff] %vm1562, %v1561
      %p1564 = scmp.lt.s32.totalorder %s14, 1
      %s1565 = scalar_select %p1564, %s14, 1
      %s1566 = smul.addr %s1565, 8
      %s1567 = scalar_lea.vmem %s3, %s1566
      // Predicated region
      $region33: #{multi_head_attention.8} parent=31 // pred_check
        %p1568 = pneg %p110
      $region34: #{multi_head_attention.8} parent=31 // pred_check_branch
        %1570 = sbr.rel (%p1568) target = $region36
      $region35: #{multi_head_attention.8} parent=31 // pred_region
        _
      $region36: #{multi_head_attention.8} parent=31 // pred_fallthru
        _
    $region32: #{multi_head_attention.8} parent=5 // pred_fallthru
      _
    %p1571 = scmp.le.s32.totalorder 2, %s9
    // Predicated region
    $region37: #{multi_head_attention.8} parent=5 // pred_check
      %p1572 = pneg %p1571
    $region38: #{multi_head_attention.8} parent=5 // pred_check_branch
      %1574 = sbr.rel (%p1572) target = $region40
    $region39: #{multi_head_attention.8} parent=5 // pred_region
      %s1575 = ssub.s32 %s9, 2
      // Predicated region
      $region41: #{multi_head_attention.8} parent=39 // pred_check
        %p1576 = pneg %p116
      $region42: #{multi_head_attention.8} parent=39 // pred_check_branch
        %1578 = sbr.rel (%p1576) target = $region44
      $region43: #{multi_head_attention.8} parent=39 // pred_region
        %p1579 = scmp.lt.s32.totalorder %s15, 1
        %s1580 = scalar_select %p1579, %s15, 1
        %s1581 = smul.addr %s1580, 8
        %s1582 = scalar_lea.vmem %s3, %s1581
      $region44: #{multi_head_attention.8} parent=39 // pred_fallthru
        _
    $region40: #{multi_head_attention.8} parent=5 // pred_fallthru
      _
  $region6: #{multi_head_attention.8} parent=0 // loop_footer
    %s13 = sadd.s32 1, %s9
  $region7: #{multi_head_attention.8} parent=0 // loop_footer_branch
    %8 = sbr.rel target = $region3
  $region8: #{multi_head_attention.8} parent=0 // loop_exit
    _

</llo_original>
